<compile_context>
chip_gen: v7x
topology: tpu7x:2x2x1
jax: 0.10.0
libtpu: 0.0.40
codegen_flags: <defaults>
</compile_context>

<pallas_src>
import functools
import math

import jax
import jax.numpy as jnp
import numpy as np
from jax.experimental import pallas as pl
from jax.experimental.pallas import tpu as pltpu


def _round_up(x, m):
    return (x + m - 1) // m * m


def _vmem_limit_bytes():
    """Per-generation VMEM limit: ~48 MiB on v7x (64 MiB/TC), ~96 MiB on v5e/v6e."""
    try:
        cap = pltpu.get_tpu_info().vmem_capacity_bytes
    except Exception:
        cap = 64 * 2**20          # conservative fallback (v7x per-TensorCore)
    return min(int(cap * 3 // 4), 96 * 2**20)


# ----------------------------------------------------------------------------
# Fused path: conv1x1 + bias + SiLU + PixelShuffle(2), fully in-kernel.
# Used when channel counts are small (VPU broadcast-FMA conv, MXU placement).
# ----------------------------------------------------------------------------

def _pick_row_pack(rows: int, w: int) -> int:
    """Smallest divisor R of rows with R*w >= 128 (full-lane vregs); else rows."""
    for r in range(1, rows + 1):
        if rows % r == 0 and r * w >= 128:
            return r
    return rows


def _make_packed_placement(w: int, R: int) -> np.ndarray:
    """(4Rw, 4Rw) 0/1 matrix.  Source lane s*Rw + rr*w + wi (s = i*2 + j) goes to
    destination lane rr*4w + i*2w + 2*wi + j: the PixelShuffle(2) interleave for
    R image rows packed along lanes."""
    L = R * w
    p = np.zeros((4 * L, 4 * L), dtype=np.float32)
    for i in range(2):
        for j in range(2):
            s = i * 2 + j
            for rr in range(R):
                for wi in range(w):
                    p[s * L + rr * w + wi, rr * 4 * w + i * 2 * w + 2 * wi + j] = 1.0
    return p


def _fused_kernel(x_ref, w_ref, b_ref, p_ref, o_ref, *, c_in, dim_out):
    # x_ref: (C_in, RT, L)        VMEM   L = R*w lanes (R packed image rows)
    # w_ref: (4*dim_out, C_in)    SMEM   row = s*dim_out + co,  s = i*2 + j
    # b_ref: (4*dim_out,)         SMEM
    # p_ref: (4L, 4L)             VMEM   constant 0/1 block-permutation
    # o_ref: (dim_out, RT, 4L)    VMEM   lane = rr*4w + i*2w + 2*wi + j
    xs = [x_ref[ci] for ci in range(c_in)]               # each (RT, L)
    p = p_ref[...]                                        # hoisted out of co loop
    for co in range(dim_out):
        # 1x1x1 conv: VPU broadcast-FMA with scalar weights from SMEM (the MXU
        # would be <1% filled at these channel counts).
        parts = []
        for s in range(4):
            row = s * dim_out + co
            acc = xs[0] * w_ref[row, 0]
            for ci in range(1, c_in):
                acc = acc + xs[ci] * w_ref[row, ci]
            parts.append(acc + b_ref[row])
        pre = jnp.concatenate(parts, axis=-1)             # (RT, 4L), lane-aligned
        act = pre * jax.nn.sigmoid(pre)                   # SiLU in f32
        # Pixel-shuffle interleave: one exact 0/1 matmul per output channel on
        # the otherwise-idle MXU (K = 4L >= 512 -> well filled), writing the
        # final lane-dense shuffled layout directly.
        o_ref[co, :, :] = jnp.dot(
            act, p, preferred_element_type=jnp.float32).astype(o_ref.dtype)


def _fused_forward(x, weight, bias, dim_out, *, row_tile=None):
    b, c, t, h, w = x.shape
    c_out = 4 * dim_out
    rows = t * h
    R = _pick_row_pack(rows, w)
    L = R * w
    rows_p = rows // R
    # Free reshape: NCTHW -> (b, c, rows/R, R*w); R image rows per packed row.
    x_p = x.reshape(b, c, rows_p, L)

    # s-major weight/bias for scalar (SMEM) access inside the kernel.
    w_sm = jnp.transpose(weight.reshape(dim_out, 4, c), (1, 0, 2)).reshape(c_out, c)
    b_sm = jnp.transpose(bias.reshape(dim_out, 4), (1, 0)).reshape(c_out)
    perm = jnp.asarray(_make_packed_placement(w, R))

    vmem_limit = _vmem_limit_bytes()
    budget = int(vmem_limit * 0.7)
    lane_in = _round_up(L, 128)
    lane_out = _round_up(4 * L, 128)

    def footprint(rt):                      # padded + double-buffered f32 bytes
        rt_pad = _round_up(rt, 8)
        x_blk = c * rt_pad * lane_in * 4
        o_blk = dim_out * rt_pad * lane_out * 4
        p_blk = _round_up(4 * L, 8) * lane_out * 4
        tmp = (c * lane_in + 6 * lane_out) * rt_pad * 4   # in-kernel temporaries
        return 2 * (x_blk + o_blk + p_blk) + tmp

    if row_tile is None:
        if rows_p <= 8 or footprint(rows_p) <= budget:
            row_tile = rows_p
        else:
            rt = max(8, rows_p // 8 * 8)
            while rt > 8 and footprint(rt) > budget:
                rt -= 8
            row_tile = rt
        # v7x: make sure both TensorCores get at least one "parallel" tile.
        if b * pl.cdiv(rows_p, row_tile) < 2 and rows_p >= 16:
            row_tile = _round_up(pl.cdiv(rows_p, 2), 8)
    n_row_tiles = pl.cdiv(rows_p, row_tile)

    n_pre = b * c_out * rows * w            # pre-shuffle activation count
    cost = pl.CostEstimate(
        flops=2 * n_pre * c + 2 * n_pre * 4 * L,
        transcendentals=n_pre,
        bytes_accessed=4 * (b * c * rows * w + n_pre + c_out * c + c_out
                            + 16 * L * L),
    )

    kernel = functools.partial(_fused_kernel, c_in=c, dim_out=dim_out)

    out = pl.pallas_call(
        kernel,
        out_shape=jax.ShapeDtypeStruct((b, dim_out, rows_p, 4 * L), x.dtype),
        grid_spec=pltpu.PrefetchScalarGridSpec(
            num_scalar_prefetch=0,
            grid=(b, n_row_tiles),
            in_specs=[
                pl.BlockSpec((None, c, row_tile, L), lambda bi, ri: (bi, 0, ri, 0)),
                pl.BlockSpec(memory_space=pltpu.MemorySpace.SMEM),   # weights
                pl.BlockSpec(memory_space=pltpu.MemorySpace.SMEM),   # bias
                pl.BlockSpec((4 * L, 4 * L), lambda bi, ri: (0, 0)),
            ],
            out_specs=pl.BlockSpec((None, dim_out, row_tile, 4 * L),
                                   lambda bi, ri: (bi, 0, ri, 0)),
        ),
        compiler_params=pltpu.CompilerParams(
            dimension_semantics=("parallel", "parallel"),
            vmem_limit_bytes=vmem_limit,
        ),
        cost_estimate=cost,
    )(x_p, w_sm, b_sm, perm)

    # Free reshape: (b, dim_out, rows/R, 4Rw) -> (b, dim_out, t, 2h, 2w)
    # (flat order already matches the shuffled output).
    return out.reshape(b, dim_out, t, 2 * h, 2 * w)


# ----------------------------------------------------------------------------
# General path: lane-dense (C_out, M) MXU matmul kernel; shuffle left to XLA.
# ----------------------------------------------------------------------------

def _conv_silu_kernel(x_ref, w_ref, b_ref, o_ref):
    # x_ref: (C_in, TM), w_ref: (co_tile, C_in), b_ref: (co_tile, 1),
    # o_ref: (co_tile, TM)
    y = jnp.dot(w_ref[...], x_ref[...], preferred_element_type=jnp.float32)
    y = y + b_ref[...]
    o_ref[...] = (y * jax.nn.sigmoid(y)).astype(o_ref.dtype)


def _matmul_forward(x, weight, bias, dim_out, *, m_tile=None):
    b, c, t, h, w = x.shape
    c_out = 4 * dim_out
    m_b = t * h * w
    x_r = x.reshape(b, c, m_b)              # free reshape; no channels-last copy
    bias2d = bias.reshape(c_out, 1)

    # Bound the resident weight block (v7x: 64 MiB VMEM) by tiling c_out.
    co_tile = c_out if c_out <= 1024 else 512
    n_co = pl.cdiv(c_out, co_tile)

    vmem_limit = _vmem_limit_bytes()
    budget = int(vmem_limit * 0.7)
    c_pad, co_pad = _round_up(c, 8), _round_up(co_tile, 8)

    def footprint(mt):                      # padded + double-buffered f32 bytes
        lane = _round_up(mt, 128)
        x_blk = c_pad * lane * 4
        o_blk = co_pad * lane * 4
        w_blk = co_pad * _round_up(c, 128) * 4
        b_blk = co_pad * 128 * 4
        tmp = 2 * co_pad * lane * 4
        return 2 * (x_blk + o_blk + w_blk + b_blk) + tmp

    if m_tile is None:
        if m_b <= 128 or footprint(m_b) <= budget:
            m_tile = m_b
        else:
            mt = max(128, m_b // 128 * 128)
            while mt > 128 and footprint(mt) > budget:
                mt -= 128
            m_tile = mt
        if b * n_co * pl.cdiv(m_b, m_tile) < 2 and m_b >= 256:
            m_tile = _round_up(pl.cdiv(m_b, 2), 128)   # feed both v7x TCs
    n_m = pl.cdiv(m_b, m_tile)

    cost = pl.CostEstimate(
        flops=2 * b * m_b * c * c_out,
        transcendentals=b * m_b * c_out,
        bytes_accessed=4 * (b * m_b * c + b * m_b * c_out + c_out * c + c_out),
    )

    y = pl.pallas_call(
        _conv_silu_kernel,
        out_shape=jax.ShapeDtypeStruct((b, c_out, m_b), x.dtype),
        grid_spec=pltpu.PrefetchScalarGridSpec(
            num_scalar_prefetch=0,
            grid=(b, n_co, n_m),
            in_specs=[
                pl.BlockSpec((None, c, m_tile), lambda bi, ci, mi: (bi, 0, mi)),
                pl.BlockSpec((co_tile, c), lambda bi, ci, mi: (ci, 0)),
                pl.BlockSpec((co_tile, 1), lambda bi, ci, mi: (ci, 0)),
            ],
            out_specs=pl.BlockSpec((None, co_tile, m_tile),
                                   lambda bi, ci, mi: (bi, ci, mi)),
        ),
        compiler_params=pltpu.CompilerParams(
            dimension_semantics=("parallel", "parallel", "parallel"),
            vmem_limit_bytes=vmem_limit,
        ),
        cost_estimate=cost,
    )(x_r, weight, bias2d)

    # TODO(synk): large-channel path still pays one XLA reshape/transpose HBM
    # pass for the pixel shuffle (the small-channel fused path above does the
    # interleave in-kernel); bf16 MXU-operand casting also deliberately skipped
    # here to keep exact-f32 parity with the PyTorch conv.
    y = y.reshape(b, dim_out, 2, 2, t, h, w)
    y = jnp.transpose(y, (0, 1, 4, 5, 2, 6, 3))
    return y.reshape(b, dim_out, t, 2 * h, 2 * w)


# ----------------------------------------------------------------------------
# Public API
# ----------------------------------------------------------------------------

def init_params(key, dim, dim_out):
    """Mirror init_conv_: kaiming-uniform (dim_out, dim), repeated 4x along out
    channels ('o ... -> (o 4) ...'), zero bias.  PyTorch layout (C_out, C_in)."""
    fan_in = dim
    gain = math.sqrt(2.0)
    bound = gain * math.sqrt(3.0 / fan_in)
    w_base = jax.random.uniform(key, (dim_out, dim), minval=-bound, maxval=bound,
                                dtype=jnp.float32)
    weight = jnp.repeat(w_base, 4, axis=0)          # (4*dim_out, dim)
    bias = jnp.zeros((4 * dim_out,), dtype=jnp.float32)
    return weight, bias


def pixel_shuffle_upsample_3d(x, weight, bias, dim_out=None, *, impl=None):
    """x: (b, c, t, h, w); weight: (4*dim_out, c); bias: (4*dim_out,).
    Returns (b, dim_out, t, 2h, 2w)."""
    b, c, t, h, w = x.shape
    if dim_out is None:
        dim_out = c
    assert weight.shape == (4 * dim_out, c)
    if impl is None:
        small = c <= 8 and dim_out <= 8
        lane_ok = _pick_row_pack(t * h, w) * w <= 256   # keep placement matrix small
        impl = "fused" if (small and lane_ok) else "matmul"
    if impl == "fused":
        return _fused_forward(x, weight, bias, dim_out)
    return _matmul_forward(x, weight, bias, dim_out)


def _reference(x, weight, bias, dim_out):
    """Pure-JAX reference of the same forward pass (f32, highest precision)."""
    b, c, t, h, w = x.shape
    y = jnp.einsum("bcthw,oc->bothw", x, weight,
                   precision=jax.lax.Precision.HIGHEST)
    y = y + bias[None, :, None, None, None]
    y = y * jax.nn.sigmoid(y)
    y = y.reshape(b, dim_out, 2, 2, t, h, w)
    y = jnp.transpose(y, (0, 1, 4, 5, 2, 6, 3))      # (b, co, t, h, i, w, j)
    return y.reshape(b, dim_out, t, 2 * h, 2 * w)


if __name__ == "__main__":
    key = jax.random.PRNGKey(0)
    k_x, k_w = jax.random.split(key)

    b, dim, t, h, w = 2, 4, 4, 8, 8
    dim_out = dim  # default(dim_out, dim)

    x = jax.random.normal(k_x, (b, dim, t, h, w), dtype=jnp.float32)
    weight, bias = init_params(k_w, dim, dim_out)

    ref = _reference(x, weight, bias, dim_out)

    # Fused (fully in-kernel shuffle, lane-packed) path — used for these dims.
    out_fused = jax.block_until_ready(
        pixel_shuffle_upsample_3d(x, weight, bias, dim_out, impl="fused"))
    assert out_fused.shape == (b, dim_out, t, 2 * h, 2 * w), out_fused.shape
    assert jnp.allclose(out_fused, ref, atol=1e-4, rtol=1e-4), "fused mismatch"

    # General MXU matmul path (used for large channel counts).
    out_mm = jax.block_until_ready(
        pixel_shuffle_upsample_3d(x, weight, bias, dim_out, impl="matmul"))
    assert out_mm.shape == (b, dim_out, t, 2 * h, 2 * w), out_mm.shape
    assert jnp.allclose(out_mm, ref, atol=1e-4, rtol=1e-4), "matmul mismatch"

    print("KERNEL_OK")
</pallas_src>

<mosaic_0001>
module attributes {stable_mosaic.version = 11 : i64} {
  func.func @_fused_kernel(%arg0: i32, %arg1: i32, %arg2: memref<1x4x2x128xf32, #tpu.memory_space<vmem>>, %arg3: memref<16x4xf32, #tpu.memory_space<smem>>, %arg4: memref<16xf32, #tpu.memory_space<smem>>, %arg5: memref<512x512xf32, #tpu.memory_space<vmem>>, %arg6: memref<1x4x2x512xf32, #tpu.memory_space<vmem>>) attributes {dimension_semantics = [#tpu.dimension_semantics<parallel>, #tpu.dimension_semantics<parallel>], iteration_bounds = array<i64: 2, 1>, scalar_prefetch = 0 : i64, scratch_operands = 0 : i64, tpu.core_type = #tpu.core_type<tc>, window_params = [{transform_indices = @transform_0, window_bounds = array<i64: 1, 4, 2, 128>}, {transform_indices = @transform_1, window_bounds = array<i64: 16, 4>}, {transform_indices = @transform_2, window_bounds = array<i64: 16>}, {pipeline_mode = #tpu.pipeline_mode<synchronous>, transform_indices = @transform_3, window_bounds = array<i64: 512, 512>}, {transform_indices = @transform_4, window_bounds = array<i64: 1, 4, 2, 512>}]} {
    %c0 = arith.constant 0 : index
    %c0_0 = arith.constant 0 : index
    %c0_1 = arith.constant 0 : index
    %c0_2 = arith.constant 0 : index
    %0 = vector.load %arg2[%c0, %c0_0, %c0_1, %c0_2] : memref<1x4x2x128xf32, #tpu.memory_space<vmem>>, vector<1x1x2x128xf32>
    %1 = vector.shape_cast %0 : vector<1x1x2x128xf32> to vector<2x128xf32>
    %c0_3 = arith.constant 0 : index
    %c1 = arith.constant 1 : index
    %c0_4 = arith.constant 0 : index
    %c0_5 = arith.constant 0 : index
    %2 = vector.load %arg2[%c0_3, %c1, %c0_4, %c0_5] : memref<1x4x2x128xf32, #tpu.memory_space<vmem>>, vector<1x1x2x128xf32>
    %3 = vector.shape_cast %2 : vector<1x1x2x128xf32> to vector<2x128xf32>
    %c0_6 = arith.constant 0 : index
    %c2 = arith.constant 2 : index
    %c0_7 = arith.constant 0 : index
    %c0_8 = arith.constant 0 : index
    %4 = vector.load %arg2[%c0_6, %c2, %c0_7, %c0_8] : memref<1x4x2x128xf32, #tpu.memory_space<vmem>>, vector<1x1x2x128xf32>
    %5 = vector.shape_cast %4 : vector<1x1x2x128xf32> to vector<2x128xf32>
    %c0_9 = arith.constant 0 : index
    %c3 = arith.constant 3 : index
    %c0_10 = arith.constant 0 : index
    %c0_11 = arith.constant 0 : index
    %6 = vector.load %arg2[%c0_9, %c3, %c0_10, %c0_11] : memref<1x4x2x128xf32, #tpu.memory_space<vmem>>, vector<1x1x2x128xf32>
    %7 = vector.shape_cast %6 : vector<1x1x2x128xf32> to vector<2x128xf32>
    %c0_12 = arith.constant 0 : index
    %c0_13 = arith.constant 0 : index
    %8 = vector.load %arg5[%c0_12, %c0_13] : memref<512x512xf32, #tpu.memory_space<vmem>>, vector<512x512xf32>
    %c0_14 = arith.constant 0 : index
    %c0_15 = arith.constant 0 : index
    %9 = memref.load %arg3[%c0_14, %c0_15] : memref<16x4xf32, #tpu.memory_space<smem>>
    %10 = vector.broadcast %9 : f32 to vector<2x128xf32>
    %11 = arith.mulf %1, %10 : vector<2x128xf32>
    %c0_16 = arith.constant 0 : index
    %c1_17 = arith.constant 1 : index
    %12 = memref.load %arg3[%c0_16, %c1_17] : memref<16x4xf32, #tpu.memory_space<smem>>
    %13 = vector.broadcast %12 : f32 to vector<2x128xf32>
    %14 = arith.mulf %3, %13 : vector<2x128xf32>
    %15 = arith.addf %11, %14 : vector<2x128xf32>
    %c0_18 = arith.constant 0 : index
    %c2_19 = arith.constant 2 : index
    %16 = memref.load %arg3[%c0_18, %c2_19] : memref<16x4xf32, #tpu.memory_space<smem>>
    %17 = vector.broadcast %16 : f32 to vector<2x128xf32>
    %18 = arith.mulf %5, %17 : vector<2x128xf32>
    %19 = arith.addf %15, %18 : vector<2x128xf32>
    %c0_20 = arith.constant 0 : index
    %c3_21 = arith.constant 3 : index
    %20 = memref.load %arg3[%c0_20, %c3_21] : memref<16x4xf32, #tpu.memory_space<smem>>
    %21 = vector.broadcast %20 : f32 to vector<2x128xf32>
    %22 = arith.mulf %7, %21 : vector<2x128xf32>
    %23 = arith.addf %19, %22 : vector<2x128xf32>
    %c0_22 = arith.constant 0 : index
    %24 = memref.load %arg4[%c0_22] : memref<16xf32, #tpu.memory_space<smem>>
    %25 = vector.broadcast %24 : f32 to vector<2x128xf32>
    %26 = arith.addf %23, %25 : vector<2x128xf32>
    %c4 = arith.constant 4 : index
    %c0_23 = arith.constant 0 : index
    %27 = memref.load %arg3[%c4, %c0_23] : memref<16x4xf32, #tpu.memory_space<smem>>
    %28 = vector.broadcast %27 : f32 to vector<2x128xf32>
    %29 = arith.mulf %1, %28 : vector<2x128xf32>
    %c4_24 = arith.constant 4 : index
    %c1_25 = arith.constant 1 : index
    %30 = memref.load %arg3[%c4_24, %c1_25] : memref<16x4xf32, #tpu.memory_space<smem>>
    %31 = vector.broadcast %30 : f32 to vector<2x128xf32>
    %32 = arith.mulf %3, %31 : vector<2x128xf32>
    %33 = arith.addf %29, %32 : vector<2x128xf32>
    %c4_26 = arith.constant 4 : index
    %c2_27 = arith.constant 2 : index
    %34 = memref.load %arg3[%c4_26, %c2_27] : memref<16x4xf32, #tpu.memory_space<smem>>
    %35 = vector.broadcast %34 : f32 to vector<2x128xf32>
    %36 = arith.mulf %5, %35 : vector<2x128xf32>
    %37 = arith.addf %33, %36 : vector<2x128xf32>
    %c4_28 = arith.constant 4 : index
    %c3_29 = arith.constant 3 : index
    %38 = memref.load %arg3[%c4_28, %c3_29] : memref<16x4xf32, #tpu.memory_space<smem>>
    %39 = vector.broadcast %38 : f32 to vector<2x128xf32>
    %40 = arith.mulf %7, %39 : vector<2x128xf32>
    %41 = arith.addf %37, %40 : vector<2x128xf32>
    %c4_30 = arith.constant 4 : index
    %42 = memref.load %arg4[%c4_30] : memref<16xf32, #tpu.memory_space<smem>>
    %43 = vector.broadcast %42 : f32 to vector<2x128xf32>
    %44 = arith.addf %41, %43 : vector<2x128xf32>
    %c8 = arith.constant 8 : index
    %c0_31 = arith.constant 0 : index
    %45 = memref.load %arg3[%c8, %c0_31] : memref<16x4xf32, #tpu.memory_space<smem>>
    %46 = vector.broadcast %45 : f32 to vector<2x128xf32>
    %47 = arith.mulf %1, %46 : vector<2x128xf32>
    %c8_32 = arith.constant 8 : index
    %c1_33 = arith.constant 1 : index
    %48 = memref.load %arg3[%c8_32, %c1_33] : memref<16x4xf32, #tpu.memory_space<smem>>
    %49 = vector.broadcast %48 : f32 to vector<2x128xf32>
    %50 = arith.mulf %3, %49 : vector<2x128xf32>
    %51 = arith.addf %47, %50 : vector<2x128xf32>
    %c8_34 = arith.constant 8 : index
    %c2_35 = arith.constant 2 : index
    %52 = memref.load %arg3[%c8_34, %c2_35] : memref<16x4xf32, #tpu.memory_space<smem>>
    %53 = vector.broadcast %52 : f32 to vector<2x128xf32>
    %54 = arith.mulf %5, %53 : vector<2x128xf32>
    %55 = arith.addf %51, %54 : vector<2x128xf32>
    %c8_36 = arith.constant 8 : index
    %c3_37 = arith.constant 3 : index
    %56 = memref.load %arg3[%c8_36, %c3_37] : memref<16x4xf32, #tpu.memory_space<smem>>
    %57 = vector.broadcast %56 : f32 to vector<2x128xf32>
    %58 = arith.mulf %7, %57 : vector<2x128xf32>
    %59 = arith.addf %55, %58 : vector<2x128xf32>
    %c8_38 = arith.constant 8 : index
    %60 = memref.load %arg4[%c8_38] : memref<16xf32, #tpu.memory_space<smem>>
    %61 = vector.broadcast %60 : f32 to vector<2x128xf32>
    %62 = arith.addf %59, %61 : vector<2x128xf32>
    %c12 = arith.constant 12 : index
    %c0_39 = arith.constant 0 : index
    %63 = memref.load %arg3[%c12, %c0_39] : memref<16x4xf32, #tpu.memory_space<smem>>
    %64 = vector.broadcast %63 : f32 to vector<2x128xf32>
    %65 = arith.mulf %1, %64 : vector<2x128xf32>
    %c12_40 = arith.constant 12 : index
    %c1_41 = arith.constant 1 : index
    %66 = memref.load %arg3[%c12_40, %c1_41] : memref<16x4xf32, #tpu.memory_space<smem>>
    %67 = vector.broadcast %66 : f32 to vector<2x128xf32>
    %68 = arith.mulf %3, %67 : vector<2x128xf32>
    %69 = arith.addf %65, %68 : vector<2x128xf32>
    %c12_42 = arith.constant 12 : index
    %c2_43 = arith.constant 2 : index
    %70 = memref.load %arg3[%c12_42, %c2_43] : memref<16x4xf32, #tpu.memory_space<smem>>
    %71 = vector.broadcast %70 : f32 to vector<2x128xf32>
    %72 = arith.mulf %5, %71 : vector<2x128xf32>
    %73 = arith.addf %69, %72 : vector<2x128xf32>
    %c12_44 = arith.constant 12 : index
    %c3_45 = arith.constant 3 : index
    %74 = memref.load %arg3[%c12_44, %c3_45] : memref<16x4xf32, #tpu.memory_space<smem>>
    %75 = vector.broadcast %74 : f32 to vector<2x128xf32>
    %76 = arith.mulf %7, %75 : vector<2x128xf32>
    %77 = arith.addf %73, %76 : vector<2x128xf32>
    %c12_46 = arith.constant 12 : index
    %78 = memref.load %arg4[%c12_46] : memref<16xf32, #tpu.memory_space<smem>>
    %79 = vector.broadcast %78 : f32 to vector<2x128xf32>
    %80 = arith.addf %77, %79 : vector<2x128xf32>
    %81 = tpu.concatenate %26, %44, %62, %80 in 1 : vector<2x128xf32>, vector<2x128xf32>, vector<2x128xf32>, vector<2x128xf32> -> vector<2x512xf32>
    %82 = arith.negf %81 : vector<2x512xf32>
    %83 = math.exp %82 : vector<2x512xf32>
    %cst = arith.constant 1.000000e+00 : f32
    %84 = vector.broadcast %cst : f32 to vector<2x512xf32>
    %85 = arith.addf %84, %83 : vector<2x512xf32>
    %86 = arith.divf %84, %85 : vector<2x512xf32>
    %87 = arith.mulf %81, %86 : vector<2x512xf32>
    %cst_47 = arith.constant dense<0.000000e+00> : vector<2x512xf32>
    %88 = tpu.matmul %87, %8, %cst_47 {dimension_numbers = #tpu.dot_dimension_numbers<[1], [0], [0], [1], [0, 0, 1, 1], [], []>} : vector<2x512xf32>, vector<512x512xf32>, vector<2x512xf32> -> vector<2x512xf32>
    %c0_48 = arith.constant 0 : index
    %c0_49 = arith.constant 0 : index
    %c0_50 = arith.constant 0 : index
    %c0_51 = arith.constant 0 : index
    %89 = vector.load %arg6[%c0_48, %c0_49, %c0_50, %c0_51] : memref<1x4x2x512xf32, #tpu.memory_space<vmem>>, vector<1x1x2x512xf32>
    %90 = vector.shape_cast %89 : vector<1x1x2x512xf32> to vector<2x512xf32>
    %91 = vector.shape_cast %88 : vector<2x512xf32> to vector<1x1x2x512xf32>
    tpu.vector_store %arg6[%c0_48, %c0_49, %c0_50, %c0_51], %91 {strides = array<i32>} : memref<1x4x2x512xf32, #tpu.memory_space<vmem>>, vector<1x1x2x512xf32>,
    %c1_52 = arith.constant 1 : index
    %c0_53 = arith.constant 0 : index
    %92 = memref.load %arg3[%c1_52, %c0_53] : memref<16x4xf32, #tpu.memory_space<smem>>
    %93 = vector.broadcast %92 : f32 to vector<2x128xf32>
    %94 = arith.mulf %1, %93 : vector<2x128xf32>
    %c1_54 = arith.constant 1 : index
    %c1_55 = arith.constant 1 : index
    %95 = memref.load %arg3[%c1_54, %c1_55] : memref<16x4xf32, #tpu.memory_space<smem>>
    %96 = vector.broadcast %95 : f32 to vector<2x128xf32>
    %97 = arith.mulf %3, %96 : vector<2x128xf32>
    %98 = arith.addf %94, %97 : vector<2x128xf32>
    %c1_56 = arith.constant 1 : index
    %c2_57 = arith.constant 2 : index
    %99 = memref.load %arg3[%c1_56, %c2_57] : memref<16x4xf32, #tpu.memory_space<smem>>
    %100 = vector.broadcast %99 : f32 to vector<2x128xf32>
    %101 = arith.mulf %5, %100 : vector<2x128xf32>
    %102 = arith.addf %98, %101 : vector<2x128xf32>
    %c1_58 = arith.constant 1 : index
    %c3_59 = arith.constant 3 : index
    %103 = memref.load %arg3[%c1_58, %c3_59] : memref<16x4xf32, #tpu.memory_space<smem>>
    %104 = vector.broadcast %103 : f32 to vector<2x128xf32>
    %105 = arith.mulf %7, %104 : vector<2x128xf32>
    %106 = arith.addf %102, %105 : vector<2x128xf32>
    %c1_60 = arith.constant 1 : index
    %107 = memref.load %arg4[%c1_60] : memref<16xf32, #tpu.memory_space<smem>>
    %108 = vector.broadcast %107 : f32 to vector<2x128xf32>
    %109 = arith.addf %106, %108 : vector<2x128xf32>
    %c5 = arith.constant 5 : index
    %c0_61 = arith.constant 0 : index
    %110 = memref.load %arg3[%c5, %c0_61] : memref<16x4xf32, #tpu.memory_space<smem>>
    %111 = vector.broadcast %110 : f32 to vector<2x128xf32>
    %112 = arith.mulf %1, %111 : vector<2x128xf32>
    %c5_62 = arith.constant 5 : index
    %c1_63 = arith.constant 1 : index
    %113 = memref.load %arg3[%c5_62, %c1_63] : memref<16x4xf32, #tpu.memory_space<smem>>
    %114 = vector.broadcast %113 : f32 to vector<2x128xf32>
    %115 = arith.mulf %3, %114 : vector<2x128xf32>
    %116 = arith.addf %112, %115 : vector<2x128xf32>
    %c5_64 = arith.constant 5 : index
    %c2_65 = arith.constant 2 : index
    %117 = memref.load %arg3[%c5_64, %c2_65] : memref<16x4xf32, #tpu.memory_space<smem>>
    %118 = vector.broadcast %117 : f32 to vector<2x128xf32>
    %119 = arith.mulf %5, %118 : vector<2x128xf32>
    %120 = arith.addf %116, %119 : vector<2x128xf32>
    %c5_66 = arith.constant 5 : index
    %c3_67 = arith.constant 3 : index
    %121 = memref.load %arg3[%c5_66, %c3_67] : memref<16x4xf32, #tpu.memory_space<smem>>
    %122 = vector.broadcast %121 : f32 to vector<2x128xf32>
    %123 = arith.mulf %7, %122 : vector<2x128xf32>
    %124 = arith.addf %120, %123 : vector<2x128xf32>
    %c5_68 = arith.constant 5 : index
    %125 = memref.load %arg4[%c5_68] : memref<16xf32, #tpu.memory_space<smem>>
    %126 = vector.broadcast %125 : f32 to vector<2x128xf32>
    %127 = arith.addf %124, %126 : vector<2x128xf32>
    %c9 = arith.constant 9 : index
    %c0_69 = arith.constant 0 : index
    %128 = memref.load %arg3[%c9, %c0_69] : memref<16x4xf32, #tpu.memory_space<smem>>
    %129 = vector.broadcast %128 : f32 to vector<2x128xf32>
    %130 = arith.mulf %1, %129 : vector<2x128xf32>
    %c9_70 = arith.constant 9 : index
    %c1_71 = arith.constant 1 : index
    %131 = memref.load %arg3[%c9_70, %c1_71] : memref<16x4xf32, #tpu.memory_space<smem>>
    %132 = vector.broadcast %131 : f32 to vector<2x128xf32>
    %133 = arith.mulf %3, %132 : vector<2x128xf32>
    %134 = arith.addf %130, %133 : vector<2x128xf32>
    %c9_72 = arith.constant 9 : index
    %c2_73 = arith.constant 2 : index
    %135 = memref.load %arg3[%c9_72, %c2_73] : memref<16x4xf32, #tpu.memory_space<smem>>
    %136 = vector.broadcast %135 : f32 to vector<2x128xf32>
    %137 = arith.mulf %5, %136 : vector<2x128xf32>
    %138 = arith.addf %134, %137 : vector<2x128xf32>
    %c9_74 = arith.constant 9 : index
    %c3_75 = arith.constant 3 : index
    %139 = memref.load %arg3[%c9_74, %c3_75] : memref<16x4xf32, #tpu.memory_space<smem>>
    %140 = vector.broadcast %139 : f32 to vector<2x128xf32>
    %141 = arith.mulf %7, %140 : vector<2x128xf32>
    %142 = arith.addf %138, %141 : vector<2x128xf32>
    %c9_76 = arith.constant 9 : index
    %143 = memref.load %arg4[%c9_76] : memref<16xf32, #tpu.memory_space<smem>>
    %144 = vector.broadcast %143 : f32 to vector<2x128xf32>
    %145 = arith.addf %142, %144 : vector<2x128xf32>
    %c13 = arith.constant 13 : index
    %c0_77 = arith.constant 0 : index
    %146 = memref.load %arg3[%c13, %c0_77] : memref<16x4xf32, #tpu.memory_space<smem>>
    %147 = vector.broadcast %146 : f32 to vector<2x128xf32>
    %148 = arith.mulf %1, %147 : vector<2x128xf32>
    %c13_78 = arith.constant 13 : index
    %c1_79 = arith.constant 1 : index
    %149 = memref.load %arg3[%c13_78, %c1_79] : memref<16x4xf32, #tpu.memory_space<smem>>
    %150 = vector.broadcast %149 : f32 to vector<2x128xf32>
    %151 = arith.mulf %3, %150 : vector<2x128xf32>
    %152 = arith.addf %148, %151 : vector<2x128xf32>
    %c13_80 = arith.constant 13 : index
    %c2_81 = arith.constant 2 : index
    %153 = memref.load %arg3[%c13_80, %c2_81] : memref<16x4xf32, #tpu.memory_space<smem>>
    %154 = vector.broadcast %153 : f32 to vector<2x128xf32>
    %155 = arith.mulf %5, %154 : vector<2x128xf32>
    %156 = arith.addf %152, %155 : vector<2x128xf32>
    %c13_82 = arith.constant 13 : index
    %c3_83 = arith.constant 3 : index
    %157 = memref.load %arg3[%c13_82, %c3_83] : memref<16x4xf32, #tpu.memory_space<smem>>
    %158 = vector.broadcast %157 : f32 to vector<2x128xf32>
    %159 = arith.mulf %7, %158 : vector<2x128xf32>
    %160 = arith.addf %156, %159 : vector<2x128xf32>
    %c13_84 = arith.constant 13 : index
    %161 = memref.load %arg4[%c13_84] : memref<16xf32, #tpu.memory_space<smem>>
    %162 = vector.broadcast %161 : f32 to vector<2x128xf32>
    %163 = arith.addf %160, %162 : vector<2x128xf32>
    %164 = tpu.concatenate %109, %127, %145, %163 in 1 : vector<2x128xf32>, vector<2x128xf32>, vector<2x128xf32>, vector<2x128xf32> -> vector<2x512xf32>
    %165 = arith.negf %164 : vector<2x512xf32>
    %166 = math.exp %165 : vector<2x512xf32>
    %cst_85 = arith.constant 1.000000e+00 : f32
    %167 = vector.broadcast %cst_85 : f32 to vector<2x512xf32>
    %168 = arith.addf %167, %166 : vector<2x512xf32>
    %169 = arith.divf %167, %168 : vector<2x512xf32>
    %170 = arith.mulf %164, %169 : vector<2x512xf32>
    %cst_86 = arith.constant dense<0.000000e+00> : vector<2x512xf32>
    %171 = tpu.matmul %170, %8, %cst_86 {dimension_numbers = #tpu.dot_dimension_numbers<[1], [0], [0], [1], [0, 0, 1, 1], [], []>} : vector<2x512xf32>, vector<512x512xf32>, vector<2x512xf32> -> vector<2x512xf32>
    %c0_87 = arith.constant 0 : index
    %c1_88 = arith.constant 1 : index
    %c0_89 = arith.constant 0 : index
    %c0_90 = arith.constant 0 : index
    %172 = vector.load %arg6[%c0_87, %c1_88, %c0_89, %c0_90] : memref<1x4x2x512xf32, #tpu.memory_space<vmem>>, vector<1x1x2x512xf32>
    %173 = vector.shape_cast %172 : vector<1x1x2x512xf32> to vector<2x512xf32>
    %174 = vector.shape_cast %171 : vector<2x512xf32> to vector<1x1x2x512xf32>
    tpu.vector_store %arg6[%c0_87, %c1_88, %c0_89, %c0_90], %174 {strides = array<i32>} : memref<1x4x2x512xf32, #tpu.memory_space<vmem>>, vector<1x1x2x512xf32>,
    %c2_91 = arith.constant 2 : index
    %c0_92 = arith.constant 0 : index
    %175 = memref.load %arg3[%c2_91, %c0_92] : memref<16x4xf32, #tpu.memory_space<smem>>
    %176 = vector.broadcast %175 : f32 to vector<2x128xf32>
    %177 = arith.mulf %1, %176 : vector<2x128xf32>
    %c2_93 = arith.constant 2 : index
    %c1_94 = arith.constant 1 : index
    %178 = memref.load %arg3[%c2_93, %c1_94] : memref<16x4xf32, #tpu.memory_space<smem>>
    %179 = vector.broadcast %178 : f32 to vector<2x128xf32>
    %180 = arith.mulf %3, %179 : vector<2x128xf32>
    %181 = arith.addf %177, %180 : vector<2x128xf32>
    %c2_95 = arith.constant 2 : index
    %c2_96 = arith.constant 2 : index
    %182 = memref.load %arg3[%c2_95, %c2_96] : memref<16x4xf32, #tpu.memory_space<smem>>
    %183 = vector.broadcast %182 : f32 to vector<2x128xf32>
    %184 = arith.mulf %5, %183 : vector<2x128xf32>
    %185 = arith.addf %181, %184 : vector<2x128xf32>
    %c2_97 = arith.constant 2 : index
    %c3_98 = arith.constant 3 : index
    %186 = memref.load %arg3[%c2_97, %c3_98] : memref<16x4xf32, #tpu.memory_space<smem>>
    %187 = vector.broadcast %186 : f32 to vector<2x128xf32>
    %188 = arith.mulf %7, %187 : vector<2x128xf32>
    %189 = arith.addf %185, %188 : vector<2x128xf32>
    %c2_99 = arith.constant 2 : index
    %190 = memref.load %arg4[%c2_99] : memref<16xf32, #tpu.memory_space<smem>>
    %191 = vector.broadcast %190 : f32 to vector<2x128xf32>
    %192 = arith.addf %189, %191 : vector<2x128xf32>
    %c6 = arith.constant 6 : index
    %c0_100 = arith.constant 0 : index
    %193 = memref.load %arg3[%c6, %c0_100] : memref<16x4xf32, #tpu.memory_space<smem>>
    %194 = vector.broadcast %193 : f32 to vector<2x128xf32>
    %195 = arith.mulf %1, %194 : vector<2x128xf32>
    %c6_101 = arith.constant 6 : index
    %c1_102 = arith.constant 1 : index
    %196 = memref.load %arg3[%c6_101, %c1_102] : memref<16x4xf32, #tpu.memory_space<smem>>
    %197 = vector.broadcast %196 : f32 to vector<2x128xf32>
    %198 = arith.mulf %3, %197 : vector<2x128xf32>
    %199 = arith.addf %195, %198 : vector<2x128xf32>
    %c6_103 = arith.constant 6 : index
    %c2_104 = arith.constant 2 : index
    %200 = memref.load %arg3[%c6_103, %c2_104] : memref<16x4xf32, #tpu.memory_space<smem>>
    %201 = vector.broadcast %200 : f32 to vector<2x128xf32>
    %202 = arith.mulf %5, %201 : vector<2x128xf32>
    %203 = arith.addf %199, %202 : vector<2x128xf32>
    %c6_105 = arith.constant 6 : index
    %c3_106 = arith.constant 3 : index
    %204 = memref.load %arg3[%c6_105, %c3_106] : memref<16x4xf32, #tpu.memory_space<smem>>
    %205 = vector.broadcast %204 : f32 to vector<2x128xf32>
    %206 = arith.mulf %7, %205 : vector<2x128xf32>
    %207 = arith.addf %203, %206 : vector<2x128xf32>
    %c6_107 = arith.constant 6 : index
    %208 = memref.load %arg4[%c6_107] : memref<16xf32, #tpu.memory_space<smem>>
    %209 = vector.broadcast %208 : f32 to vector<2x128xf32>
    %210 = arith.addf %207, %209 : vector<2x128xf32>
    %c10 = arith.constant 10 : index
    %c0_108 = arith.constant 0 : index
    %211 = memref.load %arg3[%c10, %c0_108] : memref<16x4xf32, #tpu.memory_space<smem>>
    %212 = vector.broadcast %211 : f32 to vector<2x128xf32>
    %213 = arith.mulf %1, %212 : vector<2x128xf32>
    %c10_109 = arith.constant 10 : index
    %c1_110 = arith.constant 1 : index
    %214 = memref.load %arg3[%c10_109, %c1_110] : memref<16x4xf32, #tpu.memory_space<smem>>
    %215 = vector.broadcast %214 : f32 to vector<2x128xf32>
    %216 = arith.mulf %3, %215 : vector<2x128xf32>
    %217 = arith.addf %213, %216 : vector<2x128xf32>
    %c10_111 = arith.constant 10 : index
    %c2_112 = arith.constant 2 : index
    %218 = memref.load %arg3[%c10_111, %c2_112] : memref<16x4xf32, #tpu.memory_space<smem>>
    %219 = vector.broadcast %218 : f32 to vector<2x128xf32>
    %220 = arith.mulf %5, %219 : vector<2x128xf32>
    %221 = arith.addf %217, %220 : vector<2x128xf32>
    %c10_113 = arith.constant 10 : index
    %c3_114 = arith.constant 3 : index
    %222 = memref.load %arg3[%c10_113, %c3_114] : memref<16x4xf32, #tpu.memory_space<smem>>
    %223 = vector.broadcast %222 : f32 to vector<2x128xf32>
    %224 = arith.mulf %7, %223 : vector<2x128xf32>
    %225 = arith.addf %221, %224 : vector<2x128xf32>
    %c10_115 = arith.constant 10 : index
    %226 = memref.load %arg4[%c10_115] : memref<16xf32, #tpu.memory_space<smem>>
    %227 = vector.broadcast %226 : f32 to vector<2x128xf32>
    %228 = arith.addf %225, %227 : vector<2x128xf32>
    %c14 = arith.constant 14 : index
    %c0_116 = arith.constant 0 : index
    %229 = memref.load %arg3[%c14, %c0_116] : memref<16x4xf32, #tpu.memory_space<smem>>
    %230 = vector.broadcast %229 : f32 to vector<2x128xf32>
    %231 = arith.mulf %1, %230 : vector<2x128xf32>
    %c14_117 = arith.constant 14 : index
    %c1_118 = arith.constant 1 : index
    %232 = memref.load %arg3[%c14_117, %c1_118] : memref<16x4xf32, #tpu.memory_space<smem>>
    %233 = vector.broadcast %232 : f32 to vector<2x128xf32>
    %234 = arith.mulf %3, %233 : vector<2x128xf32>
    %235 = arith.addf %231, %234 : vector<2x128xf32>
    %c14_119 = arith.constant 14 : index
    %c2_120 = arith.constant 2 : index
    %236 = memref.load %arg3[%c14_119, %c2_120] : memref<16x4xf32, #tpu.memory_space<smem>>
    %237 = vector.broadcast %236 : f32 to vector<2x128xf32>
    %238 = arith.mulf %5, %237 : vector<2x128xf32>
    %239 = arith.addf %235, %238 : vector<2x128xf32>
    %c14_121 = arith.constant 14 : index
    %c3_122 = arith.constant 3 : index
    %240 = memref.load %arg3[%c14_121, %c3_122] : memref<16x4xf32, #tpu.memory_space<smem>>
    %241 = vector.broadcast %240 : f32 to vector<2x128xf32>
    %242 = arith.mulf %7, %241 : vector<2x128xf32>
    %243 = arith.addf %239, %242 : vector<2x128xf32>
    %c14_123 = arith.constant 14 : index
    %244 = memref.load %arg4[%c14_123] : memref<16xf32, #tpu.memory_space<smem>>
    %245 = vector.broadcast %244 : f32 to vector<2x128xf32>
    %246 = arith.addf %243, %245 : vector<2x128xf32>
    %247 = tpu.concatenate %192, %210, %228, %246 in 1 : vector<2x128xf32>, vector<2x128xf32>, vector<2x128xf32>, vector<2x128xf32> -> vector<2x512xf32>
    %248 = arith.negf %247 : vector<2x512xf32>
    %249 = math.exp %248 : vector<2x512xf32>
    %cst_124 = arith.constant 1.000000e+00 : f32
    %250 = vector.broadcast %cst_124 : f32 to vector<2x512xf32>
    %251 = arith.addf %250, %249 : vector<2x512xf32>
    %252 = arith.divf %250, %251 : vector<2x512xf32>
    %253 = arith.mulf %247, %252 : vector<2x512xf32>
    %cst_125 = arith.constant dense<0.000000e+00> : vector<2x512xf32>
    %254 = tpu.matmul %253, %8, %cst_125 {dimension_numbers = #tpu.dot_dimension_numbers<[1], [0], [0], [1], [0, 0, 1, 1], [], []>} : vector<2x512xf32>, vector<512x512xf32>, vector<2x512xf32> -> vector<2x512xf32>
    %c0_126 = arith.constant 0 : index
    %c2_127 = arith.constant 2 : index
    %c0_128 = arith.constant 0 : index
    %c0_129 = arith.constant 0 : index
    %255 = vector.load %arg6[%c0_126, %c2_127, %c0_128, %c0_129] : memref<1x4x2x512xf32, #tpu.memory_space<vmem>>, vector<1x1x2x512xf32>
    %256 = vector.shape_cast %255 : vector<1x1x2x512xf32> to vector<2x512xf32>
    %257 = vector.shape_cast %254 : vector<2x512xf32> to vector<1x1x2x512xf32>
    tpu.vector_store %arg6[%c0_126, %c2_127, %c0_128, %c0_129], %257 {strides = array<i32>} : memref<1x4x2x512xf32, #tpu.memory_space<vmem>>, vector<1x1x2x512xf32>,
    %c3_130 = arith.constant 3 : index
    %c0_131 = arith.constant 0 : index
    %258 = memref.load %arg3[%c3_130, %c0_131] : memref<16x4xf32, #tpu.memory_space<smem>>
    %259 = vector.broadcast %258 : f32 to vector<2x128xf32>
    %260 = arith.mulf %1, %259 : vector<2x128xf32>
    %c3_132 = arith.constant 3 : index
    %c1_133 = arith.constant 1 : index
    %261 = memref.load %arg3[%c3_132, %c1_133] : memref<16x4xf32, #tpu.memory_space<smem>>
    %262 = vector.broadcast %261 : f32 to vector<2x128xf32>
    %263 = arith.mulf %3, %262 : vector<2x128xf32>
    %264 = arith.addf %260, %263 : vector<2x128xf32>
    %c3_134 = arith.constant 3 : index
    %c2_135 = arith.constant 2 : index
    %265 = memref.load %arg3[%c3_134, %c2_135] : memref<16x4xf32, #tpu.memory_space<smem>>
    %266 = vector.broadcast %265 : f32 to vector<2x128xf32>
    %267 = arith.mulf %5, %266 : vector<2x128xf32>
    %268 = arith.addf %264, %267 : vector<2x128xf32>
    %c3_136 = arith.constant 3 : index
    %c3_137 = arith.constant 3 : index
    %269 = memref.load %arg3[%c3_136, %c3_137] : memref<16x4xf32, #tpu.memory_space<smem>>
    %270 = vector.broadcast %269 : f32 to vector<2x128xf32>
    %271 = arith.mulf %7, %270 : vector<2x128xf32>
    %272 = arith.addf %268, %271 : vector<2x128xf32>
    %c3_138 = arith.constant 3 : index
    %273 = memref.load %arg4[%c3_138] : memref<16xf32, #tpu.memory_space<smem>>
    %274 = vector.broadcast %273 : f32 to vector<2x128xf32>
    %275 = arith.addf %272, %274 : vector<2x128xf32>
    %c7 = arith.constant 7 : index
    %c0_139 = arith.constant 0 : index
    %276 = memref.load %arg3[%c7, %c0_139] : memref<16x4xf32, #tpu.memory_space<smem>>
    %277 = vector.broadcast %276 : f32 to vector<2x128xf32>
    %278 = arith.mulf %1, %277 : vector<2x128xf32>
    %c7_140 = arith.constant 7 : index
    %c1_141 = arith.constant 1 : index
    %279 = memref.load %arg3[%c7_140, %c1_141] : memref<16x4xf32, #tpu.memory_space<smem>>
    %280 = vector.broadcast %279 : f32 to vector<2x128xf32>
    %281 = arith.mulf %3, %280 : vector<2x128xf32>
    %282 = arith.addf %278, %281 : vector<2x128xf32>
    %c7_142 = arith.constant 7 : index
    %c2_143 = arith.constant 2 : index
    %283 = memref.load %arg3[%c7_142, %c2_143] : memref<16x4xf32, #tpu.memory_space<smem>>
    %284 = vector.broadcast %283 : f32 to vector<2x128xf32>
    %285 = arith.mulf %5, %284 : vector<2x128xf32>
    %286 = arith.addf %282, %285 : vector<2x128xf32>
    %c7_144 = arith.constant 7 : index
    %c3_145 = arith.constant 3 : index
    %287 = memref.load %arg3[%c7_144, %c3_145] : memref<16x4xf32, #tpu.memory_space<smem>>
    %288 = vector.broadcast %287 : f32 to vector<2x128xf32>
    %289 = arith.mulf %7, %288 : vector<2x128xf32>
    %290 = arith.addf %286, %289 : vector<2x128xf32>
    %c7_146 = arith.constant 7 : index
    %291 = memref.load %arg4[%c7_146] : memref<16xf32, #tpu.memory_space<smem>>
    %292 = vector.broadcast %291 : f32 to vector<2x128xf32>
    %293 = arith.addf %290, %292 : vector<2x128xf32>
    %c11 = arith.constant 11 : index
    %c0_147 = arith.constant 0 : index
    %294 = memref.load %arg3[%c11, %c0_147] : memref<16x4xf32, #tpu.memory_space<smem>>
    %295 = vector.broadcast %294 : f32 to vector<2x128xf32>
    %296 = arith.mulf %1, %295 : vector<2x128xf32>
    %c11_148 = arith.constant 11 : index
    %c1_149 = arith.constant 1 : index
    %297 = memref.load %arg3[%c11_148, %c1_149] : memref<16x4xf32, #tpu.memory_space<smem>>
    %298 = vector.broadcast %297 : f32 to vector<2x128xf32>
    %299 = arith.mulf %3, %298 : vector<2x128xf32>
    %300 = arith.addf %296, %299 : vector<2x128xf32>
    %c11_150 = arith.constant 11 : index
    %c2_151 = arith.constant 2 : index
    %301 = memref.load %arg3[%c11_150, %c2_151] : memref<16x4xf32, #tpu.memory_space<smem>>
    %302 = vector.broadcast %301 : f32 to vector<2x128xf32>
    %303 = arith.mulf %5, %302 : vector<2x128xf32>
    %304 = arith.addf %300, %303 : vector<2x128xf32>
    %c11_152 = arith.constant 11 : index
    %c3_153 = arith.constant 3 : index
    %305 = memref.load %arg3[%c11_152, %c3_153] : memref<16x4xf32, #tpu.memory_space<smem>>
    %306 = vector.broadcast %305 : f32 to vector<2x128xf32>
    %307 = arith.mulf %7, %306 : vector<2x128xf32>
    %308 = arith.addf %304, %307 : vector<2x128xf32>
    %c11_154 = arith.constant 11 : index
    %309 = memref.load %arg4[%c11_154] : memref<16xf32, #tpu.memory_space<smem>>
    %310 = vector.broadcast %309 : f32 to vector<2x128xf32>
    %311 = arith.addf %308, %310 : vector<2x128xf32>
    %c15 = arith.constant 15 : index
    %c0_155 = arith.constant 0 : index
    %312 = memref.load %arg3[%c15, %c0_155] : memref<16x4xf32, #tpu.memory_space<smem>>
    %313 = vector.broadcast %312 : f32 to vector<2x128xf32>
    %314 = arith.mulf %1, %313 : vector<2x128xf32>
    %c15_156 = arith.constant 15 : index
    %c1_157 = arith.constant 1 : index
    %315 = memref.load %arg3[%c15_156, %c1_157] : memref<16x4xf32, #tpu.memory_space<smem>>
    %316 = vector.broadcast %315 : f32 to vector<2x128xf32>
    %317 = arith.mulf %3, %316 : vector<2x128xf32>
    %318 = arith.addf %314, %317 : vector<2x128xf32>
    %c15_158 = arith.constant 15 : index
    %c2_159 = arith.constant 2 : index
    %319 = memref.load %arg3[%c15_158, %c2_159] : memref<16x4xf32, #tpu.memory_space<smem>>
    %320 = vector.broadcast %319 : f32 to vector<2x128xf32>
    %321 = arith.mulf %5, %320 : vector<2x128xf32>
    %322 = arith.addf %318, %321 : vector<2x128xf32>
    %c15_160 = arith.constant 15 : index
    %c3_161 = arith.constant 3 : index
    %323 = memref.load %arg3[%c15_160, %c3_161] : memref<16x4xf32, #tpu.memory_space<smem>>
    %324 = vector.broadcast %323 : f32 to vector<2x128xf32>
    %325 = arith.mulf %7, %324 : vector<2x128xf32>
    %326 = arith.addf %322, %325 : vector<2x128xf32>
    %c15_162 = arith.constant 15 : index
    %327 = memref.load %arg4[%c15_162] : memref<16xf32, #tpu.memory_space<smem>>
    %328 = vector.broadcast %327 : f32 to vector<2x128xf32>
    %329 = arith.addf %326, %328 : vector<2x128xf32>
    %330 = tpu.concatenate %275, %293, %311, %329 in 1 : vector<2x128xf32>, vector<2x128xf32>, vector<2x128xf32>, vector<2x128xf32> -> vector<2x512xf32>
    %331 = arith.negf %330 : vector<2x512xf32>
    %332 = math.exp %331 : vector<2x512xf32>
    %cst_163 = arith.constant 1.000000e+00 : f32
    %333 = vector.broadcast %cst_163 : f32 to vector<2x512xf32>
    %334 = arith.addf %333, %332 : vector<2x512xf32>
    %335 = arith.divf %333, %334 : vector<2x512xf32>
    %336 = arith.mulf %330, %335 : vector<2x512xf32>
    %cst_164 = arith.constant dense<0.000000e+00> : vector<2x512xf32>
    %337 = tpu.matmul %336, %8, %cst_164 {dimension_numbers = #tpu.dot_dimension_numbers<[1], [0], [0], [1], [0, 0, 1, 1], [], []>} : vector<2x512xf32>, vector<512x512xf32>, vector<2x512xf32> -> vector<2x512xf32>
    %c0_165 = arith.constant 0 : index
    %c3_166 = arith.constant 3 : index
    %c0_167 = arith.constant 0 : index
    %c0_168 = arith.constant 0 : index
    %338 = vector.load %arg6[%c0_165, %c3_166, %c0_167, %c0_168] : memref<1x4x2x512xf32, #tpu.memory_space<vmem>>, vector<1x1x2x512xf32>
    %339 = vector.shape_cast %338 : vector<1x1x2x512xf32> to vector<2x512xf32>
    %340 = vector.shape_cast %337 : vector<2x512xf32> to vector<1x1x2x512xf32>
    tpu.vector_store %arg6[%c0_165, %c3_166, %c0_167, %c0_168], %340 {strides = array<i32>} : memref<1x4x2x512xf32, #tpu.memory_space<vmem>>, vector<1x1x2x512xf32>,
    return
  }
  func.func @transform_0(%arg0: i32, %arg1: i32) -> (i32, i32, i32, i32) {
    %c0_i32 = arith.constant 0 : i32
    %c0_i32_0 = arith.constant 0 : i32
    %c0_i32_1 = arith.constant 0 : i32
    return %arg0, %c0_i32, %arg1, %c0_i32_0 : i32, i32, i32, i32
  }
  func.func @transform_1(%arg0: i32, %arg1: i32) -> (i32, i32) {
    %c0_i32 = arith.constant 0 : i32
    %c0_i32_0 = arith.constant 0 : i32
    %c0_i32_1 = arith.constant 0 : i32
    return %c0_i32, %c0_i32_0 : i32, i32
  }
  func.func @transform_2(%arg0: i32, %arg1: i32) -> i32 {
    %c0_i32 = arith.constant 0 : i32
    %c0_i32_0 = arith.constant 0 : i32
    return %c0_i32 : i32
  }
  func.func @transform_3(%arg0: i32, %arg1: i32) -> (i32, i32) {
    %c0_i32 = arith.constant 0 : i32
    %c0_i32_0 = arith.constant 0 : i32
    %c0_i32_1 = arith.constant 0 : i32
    return %c0_i32, %c0_i32_0 : i32, i32
  }
  func.func @transform_4(%arg0: i32, %arg1: i32) -> (i32, i32, i32, i32) {
    %c0_i32 = arith.constant 0 : i32
    %c0_i32_0 = arith.constant 0 : i32
    %c0_i32_1 = arith.constant 0 : i32
    return %arg0, %c0_i32, %arg1, %c0_i32_0 : i32, i32, i32, i32
  }
}

</mosaic_0001>

<llo_original>
// kernel: tpu_custom_call.1
$region0: #{tpu_custom_call.1}
  #allocation0 [shape = 'u32[]', space=smem, size = 0x4, offset = 0x4, fixed_abs, tag = 'smem constant byte address 0x4 - core index']
  #allocation1 [shape = 'u32[144,128]{1,0:T(1,128)}', space=vmem, size = 0x12000, scoped, tag = 'internal scratch']
  %s0 = inlined_call_operand.vmem [shape: f32[2,4,2,128], index: 0, kind: input, shape index: {}]
  %s1 = inlined_call_operand.vmem [shape: f32[16,4], index: 1, kind: input, shape index: {}]
  %s2 = inlined_call_operand.vmem [shape: f32[16], index: 2, kind: input, shape index: {}]
  %s3 = inlined_call_operand.hbm [shape: f32[512,512], index: 3, kind: input, shape index: {}]
  %s4 = inlined_call_operand.hbm [shape: f32[2,4,2,512], index: 4, kind: output, shape index: {}]
  %s5 = sld [smem:[#allocation0]]
  $region61: #{tpu_custom_call.1} parent=0
    _
  %s7 = ssub.s32 1, %s5
  %s8 = scalar_select 0, %s7, %s5
  $region1: #{tpu_custom_call.1} parent=0
    #allocation2 [shape = 'u8[8192]{0}', space=smem, size = 0x2000, scoped, tag = 'input window, operand 1, single buffered']
    #allocation3 [shape = 's32[2]{0}', space=sflag, size = 0x8, scoped, tag = 'scoped memory for tpu_custom_call.1']
    #allocation4 [shape = 's32[2]{0}', space=sflag, size = 0x8, scoped, tag = 'scoped memory for tpu_custom_call.1']
    #allocation5 [shape = 's32[2]{0}', space=sflag, size = 0x8, scoped, tag = 'scoped memory for tpu_custom_call.1']
    #allocation6 [shape = 'u8[512]{0}', space=smem, size = 0x200, scoped, tag = 'input window, operand 2, single buffered']
    #allocation7 [shape = 's32[1]{0}', space=sflag, size = 0x4, scoped, tag = 'scoped memory for tpu_custom_call.1']
    #allocation8 [shape = 'u8[1048576]{0}', space=vmem, size = 0x100000, scoped, tag = 'input window, operand 3, single buffered']
    #allocation9 [shape = 'u8[32768]{0}', space=vmem, size = 0x8000, scoped, tag = 'output window, operand 0']
    %9 = vsyncpa [#allocation5], 0
    %10 = vsyncpa [#allocation7], 0
    %11 = vsyncpa [#allocation3], 0
    %12 = vsyncpa [#allocation4], 0
    %s13 = scalar_lea.sflag [#allocation4], 1
    %14 = vsyncpa %s13, 0
    loop: start=0, step=1, limit=4
    $region2: #{tpu_custom_call.1} parent=1 // loop_pre_header
      _
    $region3: #{tpu_custom_call.1} parent=1 // loop_header
      %s16 = sphi 0, %s20
      %p17 = scmp.ge.s32.totalorder %s16, 4
      %s23 = sphi 0, %s35
      %s24 = sphi 0, %s31
      %s25 = sphi 0, %s23
      %s26 = sphi 0, %s24
      %s27 = sphi 0, %s25
      %s28 = sphi 0, %s26
      %s40 = sphi 0, %s42
      %s43 = sphi 0, %s40
      %s44 = sphi 0, %s43
      %s60 = sphi 0, %s44
      %s64 = sphi 0, %s64
      %s66 = sphi 0, %s64
      %s67 = sphi 0, %s66
      %s81 = sphi 0, %s67
      %s85 = sphi 0, %s85
      %s87 = sphi 0, %s85
      %s88 = sphi 0, %s87
      %s102 = sphi 0, %s88
      %s106 = sphi 0, %s106
      %s108 = sphi 0, %s106
      %s109 = sphi 0, %s108
      %s123 = sphi 0, %s109
      %s131 = sphi 0, %s133
      %s134 = sphi 0, %s131
      %s135 = sphi 0, %s134
      %s151 = sphi 0, %s135
    $region4: #{tpu_custom_call.1} parent=1 // loop_header_branch
      %19 = sbr.rel (%p17) target = $region8
    $region5: #{tpu_custom_call.1} parent=1 // loop_body
      %s21 = ssub.s32 %s16, 1
      %s22 = ssub.s32 %s16, 2
      %s29 = sadd.s32 1, %s24
      %p30 = scmp.ge.s32.totalorder %s29, 1
      %s31 = scalar_select %p30, 0, %s29
      %s32 = sadd.s32 1, %s23
      %s33 = scalar_select %p30, %s32, %s23
      %p34 = scmp.ge.s32.totalorder %s33, 2
      %s35 = scalar_select %p34, 0, %s33
      %s36 = ssub.s32 %s23, %s35
      %s37 = ssub.s32 %s24, %s31
      %s38 = sor.u32 %s36, %s37
      %p39 = scmp.eq.s32.totalorder %s38, 0
      %s41 = sadd.s32 %s40, 1
      %s42 = scalar_select %p39, %s40, %s41
      %p45 = pneg %p39
      %p46 = scmp.eq.s32.totalorder %s16, 1
      %p47 = por %p45, %p46
      %p48 = scmp.ne.s32.totalorder %s40, %s43
      %p49 = scmp.eq.s32.totalorder %s16, 0
      %p50 = por %p48, %p49
      %p51 = scmp.ne.s32.totalorder %s40, %s43
      %p52 = scmp.eq.s32.totalorder %s21, 1
      %p53 = por %p51, %p52
      %p54 = scmp.ne.s32.totalorder %s43, %s44
      %p55 = scmp.eq.s32.totalorder %s21, 0
      %p56 = por %p54, %p55
      %p57 = scmp.ne.s32.totalorder %s43, %s44
      %p58 = scmp.eq.s32.totalorder %s22, 1
      %p59 = por %p57, %p58
      %p61 = scmp.ne.s32.totalorder %s44, %s60
      %p62 = scmp.eq.s32.totalorder %s22, 0
      %p63 = por %p61, %p62
      %s65 = sadd.s32 %s64, 1
      %p68 = scmp.eq.s32.totalorder %s16, 1
      %p69 = scmp.ne.s32.totalorder %s64, %s66
      %p70 = scmp.eq.s32.totalorder %s16, 0
      %p71 = por %p69, %p70
      %p72 = scmp.ne.s32.totalorder %s64, %s66
      %p73 = scmp.eq.s32.totalorder %s21, 1
      %p74 = por %p72, %p73
      %p75 = scmp.ne.s32.totalorder %s66, %s67
      %p76 = scmp.eq.s32.totalorder %s21, 0
      %p77 = por %p75, %p76
      %p78 = scmp.ne.s32.totalorder %s66, %s67
      %p79 = scmp.eq.s32.totalorder %s22, 1
      %p80 = por %p78, %p79
      %p82 = scmp.ne.s32.totalorder %s67, %s81
      %p83 = scmp.eq.s32.totalorder %s22, 0
      %p84 = por %p82, %p83
      %s86 = sadd.s32 %s85, 1
      %p89 = scmp.eq.s32.totalorder %s16, 1
      %p90 = scmp.ne.s32.totalorder %s85, %s87
      %p91 = scmp.eq.s32.totalorder %s16, 0
      %p92 = por %p90, %p91
      %p93 = scmp.ne.s32.totalorder %s85, %s87
      %p94 = scmp.eq.s32.totalorder %s21, 1
      %p95 = por %p93, %p94
      %p96 = scmp.ne.s32.totalorder %s87, %s88
      %p97 = scmp.eq.s32.totalorder %s21, 0
      %p98 = por %p96, %p97
      %p99 = scmp.ne.s32.totalorder %s87, %s88
      %p100 = scmp.eq.s32.totalorder %s22, 1
      %p101 = por %p99, %p100
      %p103 = scmp.ne.s32.totalorder %s88, %s102
      %p104 = scmp.eq.s32.totalorder %s22, 0
      %p105 = por %p103, %p104
      %s107 = sadd.s32 %s106, 1
      %p110 = scmp.eq.s32.totalorder %s16, 1
      %p111 = scmp.ne.s32.totalorder %s106, %s108
      %p112 = scmp.eq.s32.totalorder %s16, 0
      %p113 = por %p111, %p112
      %p114 = scmp.ne.s32.totalorder %s106, %s108
      %p115 = scmp.eq.s32.totalorder %s21, 1
      %p116 = por %p114, %p115
      %p117 = scmp.ne.s32.totalorder %s108, %s109
      %p118 = scmp.eq.s32.totalorder %s21, 0
      %p119 = por %p117, %p118
      %p120 = scmp.ne.s32.totalorder %s108, %s109
      %p121 = scmp.eq.s32.totalorder %s22, 1
      %p122 = por %p120, %p121
      %p124 = scmp.ne.s32.totalorder %s109, %s123
      %p125 = scmp.eq.s32.totalorder %s22, 0
      %p126 = por %p124, %p125
      %s127 = ssub.s32 %s23, %s35
      %s128 = ssub.s32 %s24, %s31
      %s129 = sor.u32 %s127, %s128
      %p130 = scmp.eq.s32.totalorder %s129, 0
      %s132 = sadd.s32 %s131, 1
      %s133 = scalar_select %p130, %s131, %s132
      %p136 = pneg %p130
      %p137 = scmp.eq.s32.totalorder %s16, 1
      %p138 = por %p136, %p137
      %p139 = scmp.ne.s32.totalorder %s131, %s134
      %p140 = scmp.eq.s32.totalorder %s16, 0
      %p141 = por %p139, %p140
      %p142 = scmp.ne.s32.totalorder %s131, %s134
      %p143 = scmp.eq.s32.totalorder %s21, 1
      %p144 = por %p142, %p143
      %p145 = scmp.ne.s32.totalorder %s134, %s135
      %p146 = scmp.eq.s32.totalorder %s21, 0
      %p147 = por %p145, %p146
      %p148 = scmp.ne.s32.totalorder %s134, %s135
      %p149 = scmp.eq.s32.totalorder %s22, 1
      %p150 = por %p148, %p149
      %p152 = scmp.ne.s32.totalorder %s135, %s151
      %p153 = scmp.eq.s32.totalorder %s22, 0
      %p154 = por %p152, %p153
      %p155 = scmp.le.s32.totalorder 1, %s16
      %p156 = scmp.lt.s32.totalorder %s16, 3
      %p157 = pnand %p155, %p156
      %p158 = pneg %p157
      // Predicated region
      $region9: #{tpu_custom_call.1} parent=5 // pred_check
        _
      $region10: #{tpu_custom_call.1} parent=5 // pred_check_branch
        %160 = sbr.rel (%p157) target = $region12
      $region11: #{tpu_custom_call.1} parent=5 // pred_region
        %s161 = ssub.s32 %s16, 1
        // Predicated region
        $region13: #{tpu_custom_call.1} parent=11 // pred_check
          %p162 = pneg %p77
        $region14: #{tpu_custom_call.1} parent=11 // pred_check_branch
          %164 = sbr.rel (%p162) target = $region16
        $region15: #{tpu_custom_call.1} parent=11 // pred_region
          %s166 = ssub.s32 256, 256
          %167 = vsyncadd [#allocation5], %s166
          %s168 = sshll.u32 %s1, 4
          %s169 = int_to_ptr.vmem [resolvable:$true] %s168
          %174 = dma.vmem_to_smem %s169, 256, [#allocation2], [#allocation5], 128, 128, 8
        $region16: #{tpu_custom_call.1} parent=11 // pred_fallthru
          _
        // Predicated region
        $region17: #{tpu_custom_call.1} parent=11 // pred_check
          %p175 = pneg %p98
        $region18: #{tpu_custom_call.1} parent=11 // pred_check_branch
          %177 = sbr.rel (%p175) target = $region20
        $region19: #{tpu_custom_call.1} parent=11 // pred_region
          %s179 = ssub.s32 16, 16
          %180 = vsyncadd [#allocation7], %s179
          %s182 = sshll.u32 %s2, 4
          %s183 = int_to_ptr.vmem [resolvable:$true] %s182
          %185 = dma.vmem_to_smem %s183, 16, [#allocation6], [#allocation7]
        $region20: #{tpu_custom_call.1} parent=11 // pred_fallthru
          _
        // Predicated region
        $region21: #{tpu_custom_call.1} parent=11 // pred_check
          %p186 = pneg %p119
        $region22: #{tpu_custom_call.1} parent=11 // pred_check_branch
          %188 = sbr.rel (%p186) target = $region24
        $region23: #{tpu_custom_call.1} parent=11 // pred_region
          %s190 = ssub.s32 32768, 32768
          %191 = vsyncadd [#allocation3], %s190
          %s192 = sshll.u32 [#allocation8], 4
          %s193 = int_to_ptr.vmem [resolvable:$true] %s192
          %198 = dma.hbm_to_vmem [thread:$0]  %s3, 32768, %s193, [#allocation3], 512, 512, 32
        $region24: #{tpu_custom_call.1} parent=11 // pred_fallthru
          _
      $region12: #{tpu_custom_call.1} parent=5 // pred_fallthru
        _
      %p199 = scmp.lt.s32.totalorder %s16, 2
      // Predicated region
      $region25: #{tpu_custom_call.1} parent=5 // pred_check
        %p200 = pneg %p199
      $region26: #{tpu_custom_call.1} parent=5 // pred_check_branch
        %202 = sbr.rel (%p200) target = $region28
      $region27: #{tpu_custom_call.1} parent=5 // pred_region
        // Predicated region
        $region29: #{tpu_custom_call.1} parent=27 // pred_check
          %p203 = pneg %p50
        $region30: #{tpu_custom_call.1} parent=27 // pred_check_branch
          %205 = sbr.rel (%p203) target = $region32
        $region31: #{tpu_custom_call.1} parent=27 // pred_region
          %p206 = scmp.lt.s32.totalorder %s23, 1
          %s207 = scalar_select %p206, %s23, 1
          %p208 = scmp.lt.s32.totalorder %s24, 0
          %s209 = scalar_select %p208, %s24, 0
          %s210 = smul.addr %s207, 4
          %s211 = sadd.s32 %s209, %s210
          %s212 = smul.addr %s211, 2
          %s213 = scalar_lea.vmem %s0, %s212
        $region32: #{tpu_custom_call.1} parent=27 // pred_fallthru
          _
      $region28: #{tpu_custom_call.1} parent=5 // pred_fallthru
        _
      %p214 = scmp.le.s32.totalorder 1, %s16
      %p215 = scmp.lt.s32.totalorder %s16, 3
      %p216 = pnand %p214, %p215
      %p217 = pneg %p216
      // Predicated region
      $region33: #{tpu_custom_call.1} parent=5 // pred_check
        _
      $region34: #{tpu_custom_call.1} parent=5 // pred_check_branch
        %219 = sbr.rel (%p216) target = $region36
      $region35: #{tpu_custom_call.1} parent=5 // pred_region
        %s220 = ssub.s32 %s16, 1
        // Predicated region
        $region37: #{tpu_custom_call.1} parent=35 // pred_check
          %p221 = pneg %p77
        $region38: #{tpu_custom_call.1} parent=35 // pred_check_branch
          %223 = sbr.rel (%p221) target = $region40
        $region39: #{tpu_custom_call.1} parent=35 // pred_region
          %224 = dma.done [#allocation5], 256
        $region40: #{tpu_custom_call.1} parent=35 // pred_fallthru
          _
        // Predicated region
        $region41: #{tpu_custom_call.1} parent=35 // pred_check
          %p225 = pneg %p98
        $region42: #{tpu_custom_call.1} parent=35 // pred_check_branch
          %227 = sbr.rel (%p225) target = $region44
        $region43: #{tpu_custom_call.1} parent=35 // pred_region
          %228 = dma.done [#allocation7], 16
        $region44: #{tpu_custom_call.1} parent=35 // pred_fallthru
          _
        // Predicated region
        $region45: #{tpu_custom_call.1} parent=35 // pred_check
          %p229 = pneg %p119
        $region46: #{tpu_custom_call.1} parent=35 // pred_check_branch
          %231 = sbr.rel (%p229) target = $region48
        $region47: #{tpu_custom_call.1} parent=35 // pred_region
          %232 = dma.done [#allocation3], 32768
        $region48: #{tpu_custom_call.1} parent=35 // pred_fallthru
          _
        %233 = sfence
        %p234 = scmp.lt.s32.totalorder %s25, 1
        %s235 = scalar_select %p234, %s25, 1
        %p236 = scmp.lt.s32.totalorder %s26, 0
        %s237 = scalar_select %p236, %s26, 0
        %s238 = smul.addr %s235, 4
        %s239 = sadd.s32 %s237, %s238
        %s240 = smul.addr %s239, 2
        %s241 = scalar_lea.vmem %s0, %s240
        %p242 = pneg %p56
        %p243 = pneg %p53
        %p244 = pneg %p77
        %p245 = pneg %p74
        %p246 = pneg %p98
        %p247 = pneg %p95
        %p248 = pneg %p119
        %p249 = pneg %p116
        %p250 = pneg %p147
        %p251 = pneg %p144
        %s252 = sand.u32 %s134, 1
        %s253 = scalar_lea.sflag [#allocation4], %s252
        %s254 = sand.u32 %s134, 1
        %s255 = smul.addr %s254, 32
        %s256 = scalar_lea.vmem [#allocation9], %s255
        %p257 = scmp.lt.s32.totalorder %s25, 1
        %s258 = scalar_select %p257, %s25, 1
        %p259 = scmp.lt.s32.totalorder %s26, 0
        %s260 = scalar_select %p259, %s26, 0
        %s261 = smul.addr %s258, 4
        %s262 = sadd.s32 %s260, %s261
        %s263 = smul.addr %s262, 2
        %s264 = scalar_lea.vmem %s0, %s263
        %v265 = vld [vmem:[%s264] sm:$0x3]
        %s266 = scalar_lea.vmem %s264, 2
        %v267 = vld [vmem:[%s266] sm:$0x3]
        %s268 = scalar_lea.vmem %s264, 4
        %v269 = vld [vmem:[%s268] sm:$0x3]
        %s270 = scalar_lea.vmem %s264, 6
        %v271 = vld [vmem:[%s270] sm:$0x3]
        %v272 = vld [vmem:[#allocation8] sm:$0xff]
        %v273 = vld [vmem:[#allocation8 + $0x8] sm:$0xff]
        %v274 = vld [vmem:[#allocation8 + $0x10] sm:$0xff]
        %v275 = vld [vmem:[#allocation8 + $0x18] sm:$0xff]
        %v276 = vld [vmem:[#allocation8 + $0x20] sm:$0xff]
        %v277 = vld [vmem:[#allocation8 + $0x28] sm:$0xff]
        %v278 = vld [vmem:[#allocation8 + $0x30] sm:$0xff]
        %v279 = vld [vmem:[#allocation8 + $0x38] sm:$0xff]
        %v280 = vld [vmem:[#allocation8 + $0x40] sm:$0xff]
        %v281 = vld [vmem:[#allocation8 + $0x48] sm:$0xff]
        %v282 = vld [vmem:[#allocation8 + $0x50] sm:$0xff]
        %v283 = vld [vmem:[#allocation8 + $0x58] sm:$0xff]
        %v284 = vld [vmem:[#allocation8 + $0x60] sm:$0xff]
        %v285 = vld [vmem:[#allocation8 + $0x68] sm:$0xff]
        %v286 = vld [vmem:[#allocation8 + $0x70] sm:$0xff]
        %v287 = vld [vmem:[#allocation8 + $0x78] sm:$0xff]
        %v288 = vld [vmem:[#allocation8 + $0x80] sm:$0xff]
        %v289 = vld [vmem:[#allocation8 + $0x88] sm:$0xff]
        %v290 = vld [vmem:[#allocation8 + $0x90] sm:$0xff]
        %v291 = vld [vmem:[#allocation8 + $0x98] sm:$0xff]
        %v292 = vld [vmem:[#allocation8 + $0xa0] sm:$0xff]
        %v293 = vld [vmem:[#allocation8 + $0xa8] sm:$0xff]
        %v294 = vld [vmem:[#allocation8 + $0xb0] sm:$0xff]
        %v295 = vld [vmem:[#allocation8 + $0xb8] sm:$0xff]
        %v296 = vld [vmem:[#allocation8 + $0xc0] sm:$0xff]
        %v297 = vld [vmem:[#allocation8 + $0xc8] sm:$0xff]
        %v298 = vld [vmem:[#allocation8 + $0xd0] sm:$0xff]
        %v299 = vld [vmem:[#allocation8 + $0xd8] sm:$0xff]
        %v300 = vld [vmem:[#allocation8 + $0xe0] sm:$0xff]
        %v301 = vld [vmem:[#allocation8 + $0xe8] sm:$0xff]
        %v302 = vld [vmem:[#allocation8 + $0xf0] sm:$0xff]
        %v303 = vld [vmem:[#allocation8 + $0xf8] sm:$0xff]
        %v304 = vld [vmem:[#allocation8 + $0x100] sm:$0xff]
        %v305 = vld [vmem:[#allocation8 + $0x108] sm:$0xff]
        %v306 = vld [vmem:[#allocation8 + $0x110] sm:$0xff]
        %v307 = vld [vmem:[#allocation8 + $0x118] sm:$0xff]
        %v308 = vld [vmem:[#allocation8 + $0x120] sm:$0xff]
        %v309 = vld [vmem:[#allocation8 + $0x128] sm:$0xff]
        %v310 = vld [vmem:[#allocation8 + $0x130] sm:$0xff]
        %v311 = vld [vmem:[#allocation8 + $0x138] sm:$0xff]
        %v312 = vld [vmem:[#allocation8 + $0x140] sm:$0xff]
        %v313 = vld [vmem:[#allocation8 + $0x148] sm:$0xff]
        %v314 = vld [vmem:[#allocation8 + $0x150] sm:$0xff]
        %v315 = vld [vmem:[#allocation8 + $0x158] sm:$0xff]
        %v316 = vld [vmem:[#allocation8 + $0x160] sm:$0xff]
        %v317 = vld [vmem:[#allocation8 + $0x168] sm:$0xff]
        %v318 = vld [vmem:[#allocation8 + $0x170] sm:$0xff]
        %v319 = vld [vmem:[#allocation8 + $0x178] sm:$0xff]
        %v320 = vld [vmem:[#allocation8 + $0x180] sm:$0xff]
        %v321 = vld [vmem:[#allocation8 + $0x188] sm:$0xff]
        %v322 = vld [vmem:[#allocation8 + $0x190] sm:$0xff]
        %v323 = vld [vmem:[#allocation8 + $0x198] sm:$0xff]
        %v324 = vld [vmem:[#allocation8 + $0x1a0] sm:$0xff]
        %v325 = vld [vmem:[#allocation8 + $0x1a8] sm:$0xff]
        %v326 = vld [vmem:[#allocation8 + $0x1b0] sm:$0xff]
        %v327 = vld [vmem:[#allocation8 + $0x1b8] sm:$0xff]
        %v328 = vld [vmem:[#allocation8 + $0x1c0] sm:$0xff]
        %v329 = vld [vmem:[#allocation8 + $0x1c8] sm:$0xff]
        %v330 = vld [vmem:[#allocation8 + $0x1d0] sm:$0xff]
        %v331 = vld [vmem:[#allocation8 + $0x1d8] sm:$0xff]
        %v332 = vld [vmem:[#allocation8 + $0x1e0] sm:$0xff]
        %v333 = vld [vmem:[#allocation8 + $0x1e8] sm:$0xff]
        %v334 = vld [vmem:[#allocation8 + $0x1f0] sm:$0xff]
        %v335 = vld [vmem:[#allocation8 + $0x1f8] sm:$0xff]
        %v336 = vld [vmem:[#allocation8 + $0x200] sm:$0xff]
        %v337 = vld [vmem:[#allocation8 + $0x208] sm:$0xff]
        %v338 = vld [vmem:[#allocation8 + $0x210] sm:$0xff]
        %v339 = vld [vmem:[#allocation8 + $0x218] sm:$0xff]
        %v340 = vld [vmem:[#allocation8 + $0x220] sm:$0xff]
        %v341 = vld [vmem:[#allocation8 + $0x228] sm:$0xff]
        %v342 = vld [vmem:[#allocation8 + $0x230] sm:$0xff]
        %v343 = vld [vmem:[#allocation8 + $0x238] sm:$0xff]
        %v344 = vld [vmem:[#allocation8 + $0x240] sm:$0xff]
        %v345 = vld [vmem:[#allocation8 + $0x248] sm:$0xff]
        %v346 = vld [vmem:[#allocation8 + $0x250] sm:$0xff]
        %v347 = vld [vmem:[#allocation8 + $0x258] sm:$0xff]
        %v348 = vld [vmem:[#allocation8 + $0x260] sm:$0xff]
        %v349 = vld [vmem:[#allocation8 + $0x268] sm:$0xff]
        %v350 = vld [vmem:[#allocation8 + $0x270] sm:$0xff]
        %v351 = vld [vmem:[#allocation8 + $0x278] sm:$0xff]
        %v352 = vld [vmem:[#allocation8 + $0x280] sm:$0xff]
        %v353 = vld [vmem:[#allocation8 + $0x288] sm:$0xff]
        %v354 = vld [vmem:[#allocation8 + $0x290] sm:$0xff]
        %v355 = vld [vmem:[#allocation8 + $0x298] sm:$0xff]
        %v356 = vld [vmem:[#allocation8 + $0x2a0] sm:$0xff]
        %v357 = vld [vmem:[#allocation8 + $0x2a8] sm:$0xff]
        %v358 = vld [vmem:[#allocation8 + $0x2b0] sm:$0xff]
        %v359 = vld [vmem:[#allocation8 + $0x2b8] sm:$0xff]
        %v360 = vld [vmem:[#allocation8 + $0x2c0] sm:$0xff]
        %v361 = vld [vmem:[#allocation8 + $0x2c8] sm:$0xff]
        %v362 = vld [vmem:[#allocation8 + $0x2d0] sm:$0xff]
        %v363 = vld [vmem:[#allocation8 + $0x2d8] sm:$0xff]
        %v364 = vld [vmem:[#allocation8 + $0x2e0] sm:$0xff]
        %v365 = vld [vmem:[#allocation8 + $0x2e8] sm:$0xff]
        %v366 = vld [vmem:[#allocation8 + $0x2f0] sm:$0xff]
        %v367 = vld [vmem:[#allocation8 + $0x2f8] sm:$0xff]
        %v368 = vld [vmem:[#allocation8 + $0x300] sm:$0xff]
        %v369 = vld [vmem:[#allocation8 + $0x308] sm:$0xff]
        %v370 = vld [vmem:[#allocation8 + $0x310] sm:$0xff]
        %v371 = vld [vmem:[#allocation8 + $0x318] sm:$0xff]
        %v372 = vld [vmem:[#allocation8 + $0x320] sm:$0xff]
        %v373 = vld [vmem:[#allocation8 + $0x328] sm:$0xff]
        %v374 = vld [vmem:[#allocation8 + $0x330] sm:$0xff]
        %v375 = vld [vmem:[#allocation8 + $0x338] sm:$0xff]
        %v376 = vld [vmem:[#allocation8 + $0x340] sm:$0xff]
        %v377 = vld [vmem:[#allocation8 + $0x348] sm:$0xff]
        %v378 = vld [vmem:[#allocation8 + $0x350] sm:$0xff]
        %v379 = vld [vmem:[#allocation8 + $0x358] sm:$0xff]
        %v380 = vld [vmem:[#allocation8 + $0x360] sm:$0xff]
        %v381 = vld [vmem:[#allocation8 + $0x368] sm:$0xff]
        %v382 = vld [vmem:[#allocation8 + $0x370] sm:$0xff]
        %v383 = vld [vmem:[#allocation8 + $0x378] sm:$0xff]
        %v384 = vld [vmem:[#allocation8 + $0x380] sm:$0xff]
        %v385 = vld [vmem:[#allocation8 + $0x388] sm:$0xff]
        %v386 = vld [vmem:[#allocation8 + $0x390] sm:$0xff]
        %v387 = vld [vmem:[#allocation8 + $0x398] sm:$0xff]
        %v388 = vld [vmem:[#allocation8 + $0x3a0] sm:$0xff]
        %v389 = vld [vmem:[#allocation8 + $0x3a8] sm:$0xff]
        %v390 = vld [vmem:[#allocation8 + $0x3b0] sm:$0xff]
        %v391 = vld [vmem:[#allocation8 + $0x3b8] sm:$0xff]
        %v392 = vld [vmem:[#allocation8 + $0x3c0] sm:$0xff]
        %v393 = vld [vmem:[#allocation8 + $0x3c8] sm:$0xff]
        %v394 = vld [vmem:[#allocation8 + $0x3d0] sm:$0xff]
        %v395 = vld [vmem:[#allocation8 + $0x3d8] sm:$0xff]
        %v396 = vld [vmem:[#allocation8 + $0x3e0] sm:$0xff]
        %v397 = vld [vmem:[#allocation8 + $0x3e8] sm:$0xff]
        %v398 = vld [vmem:[#allocation8 + $0x3f0] sm:$0xff]
        %v399 = vld [vmem:[#allocation8 + $0x3f8] sm:$0xff]
        %v400 = vld [vmem:[#allocation8 + $0x400] sm:$0xff]
        %v401 = vld [vmem:[#allocation8 + $0x408] sm:$0xff]
        %v402 = vld [vmem:[#allocation8 + $0x410] sm:$0xff]
        %v403 = vld [vmem:[#allocation8 + $0x418] sm:$0xff]
        %v404 = vld [vmem:[#allocation8 + $0x420] sm:$0xff]
        %v405 = vld [vmem:[#allocation8 + $0x428] sm:$0xff]
        %v406 = vld [vmem:[#allocation8 + $0x430] sm:$0xff]
        %v407 = vld [vmem:[#allocation8 + $0x438] sm:$0xff]
        %v408 = vld [vmem:[#allocation8 + $0x440] sm:$0xff]
        %v409 = vld [vmem:[#allocation8 + $0x448] sm:$0xff]
        %v410 = vld [vmem:[#allocation8 + $0x450] sm:$0xff]
        %v411 = vld [vmem:[#allocation8 + $0x458] sm:$0xff]
        %v412 = vld [vmem:[#allocation8 + $0x460] sm:$0xff]
        %v413 = vld [vmem:[#allocation8 + $0x468] sm:$0xff]
        %v414 = vld [vmem:[#allocation8 + $0x470] sm:$0xff]
        %v415 = vld [vmem:[#allocation8 + $0x478] sm:$0xff]
        %v416 = vld [vmem:[#allocation8 + $0x480] sm:$0xff]
        %v417 = vld [vmem:[#allocation8 + $0x488] sm:$0xff]
        %v418 = vld [vmem:[#allocation8 + $0x490] sm:$0xff]
        %v419 = vld [vmem:[#allocation8 + $0x498] sm:$0xff]
        %v420 = vld [vmem:[#allocation8 + $0x4a0] sm:$0xff]
        %v421 = vld [vmem:[#allocation8 + $0x4a8] sm:$0xff]
        %v422 = vld [vmem:[#allocation8 + $0x4b0] sm:$0xff]
        %v423 = vld [vmem:[#allocation8 + $0x4b8] sm:$0xff]
        %v424 = vld [vmem:[#allocation8 + $0x4c0] sm:$0xff]
        %v425 = vld [vmem:[#allocation8 + $0x4c8] sm:$0xff]
        %v426 = vld [vmem:[#allocation8 + $0x4d0] sm:$0xff]
        %v427 = vld [vmem:[#allocation8 + $0x4d8] sm:$0xff]
        %v428 = vld [vmem:[#allocation8 + $0x4e0] sm:$0xff]
        %v429 = vld [vmem:[#allocation8 + $0x4e8] sm:$0xff]
        %v430 = vld [vmem:[#allocation8 + $0x4f0] sm:$0xff]
        %v431 = vld [vmem:[#allocation8 + $0x4f8] sm:$0xff]
        %v432 = vld [vmem:[#allocation8 + $0x500] sm:$0xff]
        %v433 = vld [vmem:[#allocation8 + $0x508] sm:$0xff]
        %v434 = vld [vmem:[#allocation8 + $0x510] sm:$0xff]
        %v435 = vld [vmem:[#allocation8 + $0x518] sm:$0xff]
        %v436 = vld [vmem:[#allocation8 + $0x520] sm:$0xff]
        %v437 = vld [vmem:[#allocation8 + $0x528] sm:$0xff]
        %v438 = vld [vmem:[#allocation8 + $0x530] sm:$0xff]
        %v439 = vld [vmem:[#allocation8 + $0x538] sm:$0xff]
        %v440 = vld [vmem:[#allocation8 + $0x540] sm:$0xff]
        %v441 = vld [vmem:[#allocation8 + $0x548] sm:$0xff]
        %v442 = vld [vmem:[#allocation8 + $0x550] sm:$0xff]
        %v443 = vld [vmem:[#allocation8 + $0x558] sm:$0xff]
        %v444 = vld [vmem:[#allocation8 + $0x560] sm:$0xff]
        %v445 = vld [vmem:[#allocation8 + $0x568] sm:$0xff]
        %v446 = vld [vmem:[#allocation8 + $0x570] sm:$0xff]
        %v447 = vld [vmem:[#allocation8 + $0x578] sm:$0xff]
        %v448 = vld [vmem:[#allocation8 + $0x580] sm:$0xff]
        %v449 = vld [vmem:[#allocation8 + $0x588] sm:$0xff]
        %v450 = vld [vmem:[#allocation8 + $0x590] sm:$0xff]
        %v451 = vld [vmem:[#allocation8 + $0x598] sm:$0xff]
        %v452 = vld [vmem:[#allocation8 + $0x5a0] sm:$0xff]
        %v453 = vld [vmem:[#allocation8 + $0x5a8] sm:$0xff]
        %v454 = vld [vmem:[#allocation8 + $0x5b0] sm:$0xff]
        %v455 = vld [vmem:[#allocation8 + $0x5b8] sm:$0xff]
        %v456 = vld [vmem:[#allocation8 + $0x5c0] sm:$0xff]
        %v457 = vld [vmem:[#allocation8 + $0x5c8] sm:$0xff]
        %v458 = vld [vmem:[#allocation8 + $0x5d0] sm:$0xff]
        %v459 = vld [vmem:[#allocation8 + $0x5d8] sm:$0xff]
        %v460 = vld [vmem:[#allocation8 + $0x5e0] sm:$0xff]
        %v461 = vld [vmem:[#allocation8 + $0x5e8] sm:$0xff]
        %v462 = vld [vmem:[#allocation8 + $0x5f0] sm:$0xff]
        %v463 = vld [vmem:[#allocation8 + $0x5f8] sm:$0xff]
        %v464 = vld [vmem:[#allocation8 + $0x600] sm:$0xff]
        %v465 = vld [vmem:[#allocation8 + $0x608] sm:$0xff]
        %v466 = vld [vmem:[#allocation8 + $0x610] sm:$0xff]
        %v467 = vld [vmem:[#allocation8 + $0x618] sm:$0xff]
        %v468 = vld [vmem:[#allocation8 + $0x620] sm:$0xff]
        %v469 = vld [vmem:[#allocation8 + $0x628] sm:$0xff]
        %v470 = vld [vmem:[#allocation8 + $0x630] sm:$0xff]
        %v471 = vld [vmem:[#allocation8 + $0x638] sm:$0xff]
        %v472 = vld [vmem:[#allocation8 + $0x640] sm:$0xff]
        %v473 = vld [vmem:[#allocation8 + $0x648] sm:$0xff]
        %v474 = vld [vmem:[#allocation8 + $0x650] sm:$0xff]
        %v475 = vld [vmem:[#allocation8 + $0x658] sm:$0xff]
        %v476 = vld [vmem:[#allocation8 + $0x660] sm:$0xff]
        %v477 = vld [vmem:[#allocation8 + $0x668] sm:$0xff]
        %v478 = vld [vmem:[#allocation8 + $0x670] sm:$0xff]
        %v479 = vld [vmem:[#allocation8 + $0x678] sm:$0xff]
        %v480 = vld [vmem:[#allocation8 + $0x680] sm:$0xff]
        %v481 = vld [vmem:[#allocation8 + $0x688] sm:$0xff]
        %v482 = vld [vmem:[#allocation8 + $0x690] sm:$0xff]
        %v483 = vld [vmem:[#allocation8 + $0x698] sm:$0xff]
        %v484 = vld [vmem:[#allocation8 + $0x6a0] sm:$0xff]
        %v485 = vld [vmem:[#allocation8 + $0x6a8] sm:$0xff]
        %v486 = vld [vmem:[#allocation8 + $0x6b0] sm:$0xff]
        %v487 = vld [vmem:[#allocation8 + $0x6b8] sm:$0xff]
        %v488 = vld [vmem:[#allocation8 + $0x6c0] sm:$0xff]
        %v489 = vld [vmem:[#allocation8 + $0x6c8] sm:$0xff]
        %v490 = vld [vmem:[#allocation8 + $0x6d0] sm:$0xff]
        %v491 = vld [vmem:[#allocation8 + $0x6d8] sm:$0xff]
        %v492 = vld [vmem:[#allocation8 + $0x6e0] sm:$0xff]
        %v493 = vld [vmem:[#allocation8 + $0x6e8] sm:$0xff]
        %v494 = vld [vmem:[#allocation8 + $0x6f0] sm:$0xff]
        %v495 = vld [vmem:[#allocation8 + $0x6f8] sm:$0xff]
        %v496 = vld [vmem:[#allocation8 + $0x700] sm:$0xff]
        %v497 = vld [vmem:[#allocation8 + $0x708] sm:$0xff]
        %v498 = vld [vmem:[#allocation8 + $0x710] sm:$0xff]
        %v499 = vld [vmem:[#allocation8 + $0x718] sm:$0xff]
        %v500 = vld [vmem:[#allocation8 + $0x720] sm:$0xff]
        %v501 = vld [vmem:[#allocation8 + $0x728] sm:$0xff]
        %v502 = vld [vmem:[#allocation8 + $0x730] sm:$0xff]
        %v503 = vld [vmem:[#allocation8 + $0x738] sm:$0xff]
        %v504 = vld [vmem:[#allocation8 + $0x740] sm:$0xff]
        %v505 = vld [vmem:[#allocation8 + $0x748] sm:$0xff]
        %v506 = vld [vmem:[#allocation8 + $0x750] sm:$0xff]
        %v507 = vld [vmem:[#allocation8 + $0x758] sm:$0xff]
        %v508 = vld [vmem:[#allocation8 + $0x760] sm:$0xff]
        %v509 = vld [vmem:[#allocation8 + $0x768] sm:$0xff]
        %v510 = vld [vmem:[#allocation8 + $0x770] sm:$0xff]
        %v511 = vld [vmem:[#allocation8 + $0x778] sm:$0xff]
        %v512 = vld [vmem:[#allocation8 + $0x780] sm:$0xff]
        %v513 = vld [vmem:[#allocation8 + $0x788] sm:$0xff]
        %v514 = vld [vmem:[#allocation8 + $0x790] sm:$0xff]
        %v515 = vld [vmem:[#allocation8 + $0x798] sm:$0xff]
        %v516 = vld [vmem:[#allocation8 + $0x7a0] sm:$0xff]
        %v517 = vld [vmem:[#allocation8 + $0x7a8] sm:$0xff]
        %v518 = vld [vmem:[#allocation8 + $0x7b0] sm:$0xff]
        %v519 = vld [vmem:[#allocation8 + $0x7b8] sm:$0xff]
        %v520 = vld [vmem:[#allocation8 + $0x7c0] sm:$0xff]
        %v521 = vld [vmem:[#allocation8 + $0x7c8] sm:$0xff]
        %v522 = vld [vmem:[#allocation8 + $0x7d0] sm:$0xff]
        %v523 = vld [vmem:[#allocation8 + $0x7d8] sm:$0xff]
        %v524 = vld [vmem:[#allocation8 + $0x7e0] sm:$0xff]
        %v525 = vld [vmem:[#allocation8 + $0x7e8] sm:$0xff]
        %v526 = vld [vmem:[#allocation8 + $0x7f0] sm:$0xff]
        %v527 = vld [vmem:[#allocation8 + $0x7f8] sm:$0xff]
        %s528 = sld [smem:[#allocation2]]
        %v529 = vstv %s528
        %v530 = vmul.f32 %v265, %v529
        %s531 = sld [smem:[#allocation2 + $0x1]]
        %v532 = vstv %s531
        %v533 = vmul.f32 %v267, %v532
        %v534 = vadd.f32 %v530, %v533
        %s535 = sld [smem:[#allocation2 + $0x2]]
        %v536 = vstv %s535
        %v537 = vmul.f32 %v269, %v536
        %v538 = vadd.f32 %v534, %v537
        %s539 = sld [smem:[#allocation2 + $0x3]]
        %v540 = vstv %s539
        %v541 = vmul.f32 %v271, %v540
        %v542 = vadd.f32 %v538, %v541
        %s543 = sld [smem:[#allocation6]]
        %v544 = vstv %s543
        %v545 = vadd.f32 %v542, %v544
        %s546 = sld [smem:[#allocation2 + $0x200]]
        %v547 = vstv %s546
        %v548 = vmul.f32 %v265, %v547
        %s549 = sld [smem:[#allocation2 + $0x201]]
        %v550 = vstv %s549
        %v551 = vmul.f32 %v267, %v550
        %v552 = vadd.f32 %v548, %v551
        %s553 = sld [smem:[#allocation2 + $0x202]]
        %v554 = vstv %s553
        %v555 = vmul.f32 %v269, %v554
        %v556 = vadd.f32 %v552, %v555
        %s557 = sld [smem:[#allocation2 + $0x203]]
        %v558 = vstv %s557
        %v559 = vmul.f32 %v271, %v558
        %v560 = vadd.f32 %v556, %v559
        %s561 = sld [smem:[#allocation6 + $0x4]]
        %v562 = vstv %s561
        %v563 = vadd.f32 %v560, %v562
        %s564 = sld [smem:[#allocation2 + $0x400]]
        %v565 = vstv %s564
        %v566 = vmul.f32 %v265, %v565
        %s567 = sld [smem:[#allocation2 + $0x401]]
        %v568 = vstv %s567
        %v569 = vmul.f32 %v267, %v568
        %v570 = vadd.f32 %v566, %v569
        %s571 = sld [smem:[#allocation2 + $0x402]]
        %v572 = vstv %s571
        %v573 = vmul.f32 %v269, %v572
        %v574 = vadd.f32 %v570, %v573
        %s575 = sld [smem:[#allocation2 + $0x403]]
        %v576 = vstv %s575
        %v577 = vmul.f32 %v271, %v576
        %v578 = vadd.f32 %v574, %v577
        %s579 = sld [smem:[#allocation6 + $0x8]]
        %v580 = vstv %s579
        %v581 = vadd.f32 %v578, %v580
        %s582 = sld [smem:[#allocation2 + $0x600]]
        %v583 = vstv %s582
        %v584 = vmul.f32 %v265, %v583
        %s585 = sld [smem:[#allocation2 + $0x601]]
        %v586 = vstv %s585
        %v587 = vmul.f32 %v267, %v586
        %v588 = vadd.f32 %v584, %v587
        %s589 = sld [smem:[#allocation2 + $0x602]]
        %v590 = vstv %s589
        %v591 = vmul.f32 %v269, %v590
        %v592 = vadd.f32 %v588, %v591
        %s593 = sld [smem:[#allocation2 + $0x603]]
        %v594 = vstv %s593
        %v595 = vmul.f32 %v271, %v594
        %v596 = vadd.f32 %v592, %v595
        %s597 = sld [smem:[#allocation6 + $0xc]]
        %v598 = vstv %s597
        %v599 = vadd.f32 %v596, %v598
        %v600 = vxor.u32 %v545, 2147483648
        %v601 = vxor.u32 %v563, 2147483648
        %v602 = vxor.u32 %v581, 2147483648
        %v603 = vxor.u32 %v599, 2147483648
        %v604 = vmul.f32 %v600, 1.442695
        %v605 = vpow.pop %v604
        %v606 = vmul.f32 %v601, 1.442695
        %v607 = vpow.pop %v606
        %v608 = vmul.f32 %v602, 1.442695
        %v609 = vpow.pop %v608
        %v610 = vmul.f32 %v603, 1.442695
        %v611 = vpow.pop %v610
        %v612 = vadd.f32 %v605, 1.0
        %v613 = vadd.f32 %v607, 1.0
        %v614 = vadd.f32 %v609, 1.0
        %v615 = vadd.f32 %v611, 1.0
        %v616 = vrcp.pop %v612
        %v617 = vmul.f32 1.0, %v616
        %v618 = vrcp.pop %v613
        %v619 = vmul.f32 1.0, %v618
        %v620 = vrcp.pop %v614
        %v621 = vmul.f32 1.0, %v620
        %v622 = vrcp.pop %v615
        %v623 = vmul.f32 1.0, %v622
        %v624 = vmul.f32 %v545, %v617
        %v625 = vmul.f32 %v563, %v619
        %v626 = vmul.f32 %v581, %v621
        %v627 = vmul.f32 %v599, %v623
        %628 = vmatprep.subr.mxu0 %v273
        %629 = vmatpush1.msra.mxu0 %v272
        %630 = vmatprep.subr.mxu0 %v277
        %631 = vmatpush1.msra.mxu0 %v276
        %632 = vmatprep.subr.mxu0 %v281
        %633 = vmatpush1.msra.mxu0 %v280
        %634 = vmatprep.subr.mxu0 %v285
        %635 = vmatpush1.msra.mxu0 %v284
        %636 = vmatprep.subr.mxu0 %v289
        %637 = vmatpush1.msra.mxu0 %v288
        %638 = vmatprep.subr.mxu0 %v293
        %639 = vmatpush1.msra.mxu0 %v292
        %640 = vmatprep.subr.mxu0 %v297
        %641 = vmatpush1.msra.mxu0 %v296
        %642 = vmatprep.subr.mxu0 %v301
        %643 = vmatpush1.msra.mxu0 %v300
        %644 = vmatprep.subr.mxu0 %v305
        %645 = vmatpush1.msra.mxu0 %v304
        %646 = vmatprep.subr.mxu0 %v309
        %647 = vmatpush1.msra.mxu0 %v308
        %648 = vmatprep.subr.mxu0 %v313
        %649 = vmatpush1.msra.mxu0 %v312
        %650 = vmatprep.subr.mxu0 %v317
        %651 = vmatpush1.msra.mxu0 %v316
        %652 = vmatprep.subr.mxu0 %v321
        %653 = vmatpush1.msra.mxu0 %v320
        %654 = vmatprep.subr.mxu0 %v325
        %655 = vmatpush1.msra.mxu0 %v324
        %656 = vmatprep.subr.mxu0 %v329
        %657 = vmatpush1.msra.mxu0 %v328
        %658 = vmatprep.subr.mxu0 %v333
        %659 = vmatpush1.msra.mxu0 %v332
        %660 = vmatprep.subr.mxu0 %v337
        %661 = vmatpush1.msra.mxu0 %v336
        %662 = vmatprep.subr.mxu0 %v341
        %663 = vmatpush1.msra.mxu0 %v340
        %664 = vmatprep.subr.mxu0 %v345
        %665 = vmatpush1.msra.mxu0 %v344
        %666 = vmatprep.subr.mxu0 %v349
        %667 = vmatpush1.msra.mxu0 %v348
        %668 = vmatprep.subr.mxu0 %v353
        %669 = vmatpush1.msra.mxu0 %v352
        %670 = vmatprep.subr.mxu0 %v357
        %671 = vmatpush1.msra.mxu0 %v356
        %672 = vmatprep.subr.mxu0 %v361
        %673 = vmatpush1.msra.mxu0 %v360
        %674 = vmatprep.subr.mxu0 %v365
        %675 = vmatpush1.msra.mxu0 %v364
        %676 = vmatprep.subr.mxu0 %v369
        %677 = vmatpush1.msra.mxu0 %v368
        %678 = vmatprep.subr.mxu0 %v373
        %679 = vmatpush1.msra.mxu0 %v372
        %680 = vmatprep.subr.mxu0 %v377
        %681 = vmatpush1.msra.mxu0 %v376
        %682 = vmatprep.subr.mxu0 %v381
        %683 = vmatpush1.msra.mxu0 %v380
        %684 = vmatprep.subr.mxu0 %v385
        %685 = vmatpush1.msra.mxu0 %v384
        %686 = vmatprep.subr.mxu0 %v389
        %687 = vmatpush1.msra.mxu0 %v388
        %688 = vmatprep.subr.mxu0 %v393
        %689 = vmatpush1.msra.mxu0 %v392
        %690 = vmatprep.subr.mxu0 %v397
        %691 = vmatpush1.msra.mxu0 %v396
        %692 = vmatprep.mubr.f32.mxu0 %v625
        %693 = vmatmul.mubr.f32.gmra.mrb[0].mxu0 %v624
        %v694 = vpop.f32.mrb[0].mxu0
        %v695 = vadd.f32 0.0, %v694
        %v696 = vpop.f32.mrb[0].mxu0
        %v697 = vadd.f32 0.0, %v696
        %698 = vdwg.mxu0
        %699 = vmatprep.subr.mxu0 %v401
        %700 = vmatpush1.msra.mxu0 %v400
        %701 = vmatprep.subr.mxu0 %v405
        %702 = vmatpush1.msra.mxu0 %v404
        %703 = vmatprep.subr.mxu0 %v409
        %704 = vmatpush1.msra.mxu0 %v408
        %705 = vmatprep.subr.mxu0 %v413
        %706 = vmatpush1.msra.mxu0 %v412
        %707 = vmatprep.subr.mxu0 %v417
        %708 = vmatpush1.msra.mxu0 %v416
        %709 = vmatprep.subr.mxu0 %v421
        %710 = vmatpush1.msra.mxu0 %v420
        %711 = vmatprep.subr.mxu0 %v425
        %712 = vmatpush1.msra.mxu0 %v424
        %713 = vmatprep.subr.mxu0 %v429
        %714 = vmatpush1.msra.mxu0 %v428
        %715 = vmatprep.subr.mxu0 %v433
        %716 = vmatpush1.msra.mxu0 %v432
        %717 = vmatprep.subr.mxu0 %v437
        %718 = vmatpush1.msra.mxu0 %v436
        %719 = vmatprep.subr.mxu0 %v441
        %720 = vmatpush1.msra.mxu0 %v440
        %721 = vmatprep.subr.mxu0 %v445
        %722 = vmatpush1.msra.mxu0 %v444
        %723 = vmatprep.subr.mxu0 %v449
        %724 = vmatpush1.msra.mxu0 %v448
        %725 = vmatprep.subr.mxu0 %v453
        %726 = vmatpush1.msra.mxu0 %v452
        %727 = vmatprep.subr.mxu0 %v457
        %728 = vmatpush1.msra.mxu0 %v456
        %729 = vmatprep.subr.mxu0 %v461
        %730 = vmatpush1.msra.mxu0 %v460
        %731 = vmatprep.subr.mxu0 %v465
        %732 = vmatpush1.msra.mxu0 %v464
        %733 = vmatprep.subr.mxu0 %v469
        %734 = vmatpush1.msra.mxu0 %v468
        %735 = vmatprep.subr.mxu0 %v473
        %736 = vmatpush1.msra.mxu0 %v472
        %737 = vmatprep.subr.mxu0 %v477
        %738 = vmatpush1.msra.mxu0 %v476
        %739 = vmatprep.subr.mxu0 %v481
        %740 = vmatpush1.msra.mxu0 %v480
        %741 = vmatprep.subr.mxu0 %v485
        %742 = vmatpush1.msra.mxu0 %v484
        %743 = vmatprep.subr.mxu0 %v489
        %744 = vmatpush1.msra.mxu0 %v488
        %745 = vmatprep.subr.mxu0 %v493
        %746 = vmatpush1.msra.mxu0 %v492
        %747 = vmatprep.subr.mxu0 %v497
        %748 = vmatpush1.msra.mxu0 %v496
        %749 = vmatprep.subr.mxu0 %v501
        %750 = vmatpush1.msra.mxu0 %v500
        %751 = vmatprep.subr.mxu0 %v505
        %752 = vmatpush1.msra.mxu0 %v504
        %753 = vmatprep.subr.mxu0 %v509
        %754 = vmatpush1.msra.mxu0 %v508
        %755 = vmatprep.subr.mxu0 %v513
        %756 = vmatpush1.msra.mxu0 %v512
        %757 = vmatprep.subr.mxu0 %v517
        %758 = vmatpush1.msra.mxu0 %v516
        %759 = vmatprep.subr.mxu0 %v521
        %760 = vmatpush1.msra.mxu0 %v520
        %761 = vmatprep.subr.mxu0 %v525
        %762 = vmatpush1.msra.mxu0 %v524
        %763 = vmatprep.mubr.f32.mxu0 %v627
        %764 = vmatmul.mubr.f32.gmra.mrb[0].mxu0 %v626
        %v765 = vpop.f32.mrb[0].mxu0
        %v766 = vadd.f32 %v695, %v765
        %v767 = vpop.f32.mrb[0].mxu0
        %v768 = vadd.f32 %v697, %v767
        %769 = vdwg.mxu0
        %770 = vmatprep.subr.mxu0 %v275
        %771 = vmatpush1.msra.mxu0 %v274
        %772 = vmatprep.subr.mxu0 %v279
        %773 = vmatpush1.msra.mxu0 %v278
        %774 = vmatprep.subr.mxu0 %v283
        %775 = vmatpush1.msra.mxu0 %v282
        %776 = vmatprep.subr.mxu0 %v287
        %777 = vmatpush1.msra.mxu0 %v286
        %778 = vmatprep.subr.mxu0 %v291
        %779 = vmatpush1.msra.mxu0 %v290
        %780 = vmatprep.subr.mxu0 %v295
        %781 = vmatpush1.msra.mxu0 %v294
        %782 = vmatprep.subr.mxu0 %v299
        %783 = vmatpush1.msra.mxu0 %v298
        %784 = vmatprep.subr.mxu0 %v303
        %785 = vmatpush1.msra.mxu0 %v302
        %786 = vmatprep.subr.mxu0 %v307
        %787 = vmatpush1.msra.mxu0 %v306
        %788 = vmatprep.subr.mxu0 %v311
        %789 = vmatpush1.msra.mxu0 %v310
        %790 = vmatprep.subr.mxu0 %v315
        %791 = vmatpush1.msra.mxu0 %v314
        %792 = vmatprep.subr.mxu0 %v319
        %793 = vmatpush1.msra.mxu0 %v318
        %794 = vmatprep.subr.mxu0 %v323
        %795 = vmatpush1.msra.mxu0 %v322
        %796 = vmatprep.subr.mxu0 %v327
        %797 = vmatpush1.msra.mxu0 %v326
        %798 = vmatprep.subr.mxu0 %v331
        %799 = vmatpush1.msra.mxu0 %v330
        %800 = vmatprep.subr.mxu0 %v335
        %801 = vmatpush1.msra.mxu0 %v334
        %802 = vmatprep.subr.mxu0 %v339
        %803 = vmatpush1.msra.mxu0 %v338
        %804 = vmatprep.subr.mxu0 %v343
        %805 = vmatpush1.msra.mxu0 %v342
        %806 = vmatprep.subr.mxu0 %v347
        %807 = vmatpush1.msra.mxu0 %v346
        %808 = vmatprep.subr.mxu0 %v351
        %809 = vmatpush1.msra.mxu0 %v350
        %810 = vmatprep.subr.mxu0 %v355
        %811 = vmatpush1.msra.mxu0 %v354
        %812 = vmatprep.subr.mxu0 %v359
        %813 = vmatpush1.msra.mxu0 %v358
        %814 = vmatprep.subr.mxu0 %v363
        %815 = vmatpush1.msra.mxu0 %v362
        %816 = vmatprep.subr.mxu0 %v367
        %817 = vmatpush1.msra.mxu0 %v366
        %818 = vmatprep.subr.mxu0 %v371
        %819 = vmatpush1.msra.mxu0 %v370
        %820 = vmatprep.subr.mxu0 %v375
        %821 = vmatpush1.msra.mxu0 %v374
        %822 = vmatprep.subr.mxu0 %v379
        %823 = vmatpush1.msra.mxu0 %v378
        %824 = vmatprep.subr.mxu0 %v383
        %825 = vmatpush1.msra.mxu0 %v382
        %826 = vmatprep.subr.mxu0 %v387
        %827 = vmatpush1.msra.mxu0 %v386
        %828 = vmatprep.subr.mxu0 %v391
        %829 = vmatpush1.msra.mxu0 %v390
        %830 = vmatprep.subr.mxu0 %v395
        %831 = vmatpush1.msra.mxu0 %v394
        %832 = vmatprep.subr.mxu0 %v399
        %833 = vmatpush1.msra.mxu0 %v398
        %834 = vmatprep.mubr.f32.mxu0 %v625
        %835 = vmatmul.mubr.f32.gmra.mrb[0].mxu0 %v624
        %v836 = vpop.f32.mrb[0].mxu0
        %v837 = vadd.f32 0.0, %v836
        %v838 = vpop.f32.mrb[0].mxu0
        %v839 = vadd.f32 0.0, %v838
        %840 = vdwg.mxu0
        %841 = vmatprep.subr.mxu0 %v403
        %842 = vmatpush1.msra.mxu0 %v402
        %843 = vmatprep.subr.mxu0 %v407
        %844 = vmatpush1.msra.mxu0 %v406
        %845 = vmatprep.subr.mxu0 %v411
        %846 = vmatpush1.msra.mxu0 %v410
        %847 = vmatprep.subr.mxu0 %v415
        %848 = vmatpush1.msra.mxu0 %v414
        %849 = vmatprep.subr.mxu0 %v419
        %850 = vmatpush1.msra.mxu0 %v418
        %851 = vmatprep.subr.mxu0 %v423
        %852 = vmatpush1.msra.mxu0 %v422
        %853 = vmatprep.subr.mxu0 %v427
        %854 = vmatpush1.msra.mxu0 %v426
        %855 = vmatprep.subr.mxu0 %v431
        %856 = vmatpush1.msra.mxu0 %v430
        %857 = vmatprep.subr.mxu0 %v435
        %858 = vmatpush1.msra.mxu0 %v434
        %859 = vmatprep.subr.mxu0 %v439
        %860 = vmatpush1.msra.mxu0 %v438
        %861 = vmatprep.subr.mxu0 %v443
        %862 = vmatpush1.msra.mxu0 %v442
        %863 = vmatprep.subr.mxu0 %v447
        %864 = vmatpush1.msra.mxu0 %v446
        %865 = vmatprep.subr.mxu0 %v451
        %866 = vmatpush1.msra.mxu0 %v450
        %867 = vmatprep.subr.mxu0 %v455
        %868 = vmatpush1.msra.mxu0 %v454
        %869 = vmatprep.subr.mxu0 %v459
        %870 = vmatpush1.msra.mxu0 %v458
        %871 = vmatprep.subr.mxu0 %v463
        %872 = vmatpush1.msra.mxu0 %v462
        %873 = vmatprep.subr.mxu0 %v467
        %874 = vmatpush1.msra.mxu0 %v466
        %875 = vmatprep.subr.mxu0 %v471
        %876 = vmatpush1.msra.mxu0 %v470
        %877 = vmatprep.subr.mxu0 %v475
        %878 = vmatpush1.msra.mxu0 %v474
        %879 = vmatprep.subr.mxu0 %v479
        %880 = vmatpush1.msra.mxu0 %v478
        %881 = vmatprep.subr.mxu0 %v483
        %882 = vmatpush1.msra.mxu0 %v482
        %883 = vmatprep.subr.mxu0 %v487
        %884 = vmatpush1.msra.mxu0 %v486
        %885 = vmatprep.subr.mxu0 %v491
        %886 = vmatpush1.msra.mxu0 %v490
        %887 = vmatprep.subr.mxu0 %v495
        %888 = vmatpush1.msra.mxu0 %v494
        %889 = vmatprep.subr.mxu0 %v499
        %890 = vmatpush1.msra.mxu0 %v498
        %891 = vmatprep.subr.mxu0 %v503
        %892 = vmatpush1.msra.mxu0 %v502
        %893 = vmatprep.subr.mxu0 %v507
        %894 = vmatpush1.msra.mxu0 %v506
        %895 = vmatprep.subr.mxu0 %v511
        %896 = vmatpush1.msra.mxu0 %v510
        %897 = vmatprep.subr.mxu0 %v515
        %898 = vmatpush1.msra.mxu0 %v514
        %899 = vmatprep.subr.mxu0 %v519
        %900 = vmatpush1.msra.mxu0 %v518
        %901 = vmatprep.subr.mxu0 %v523
        %902 = vmatpush1.msra.mxu0 %v522
        %903 = vmatprep.subr.mxu0 %v527
        %904 = vmatpush1.msra.mxu0 %v526
        %905 = vmatprep.mubr.f32.mxu0 %v627
        %906 = vmatmul.mubr.f32.gmra.mrb[0].mxu0 %v626
        %v907 = vpop.f32.mrb[0].mxu0
        %v908 = vadd.f32 %v837, %v907
        %v909 = vpop.f32.mrb[0].mxu0
        %v910 = vadd.f32 %v839, %v909
        %911 = vdwg.mxu0
        %v916 = vcombine.low %v766, %v768
        %v917 = vcombine.low %v908, %v910
        %v919 = vunpack.c.l.s4 1983009808
        %v920 = vunpack.c.0.s8 %v919
        %v921 = vlaneseq
        %v922 = vshrl.u32 %v921, 7
        %v923 = vsub.s32 %v920, %v922
        %v924 = vrot.slane %v916, %v923
        %v926 = vunpack.c.l.s4 1983009808
        %v927 = vunpack.c.0.s8 %v926
        %v928 = vlaneseq
        %v929 = vshrl.u32 %v928, 7
        %v930 = vsub.s32 %v927, %v929
        %v931 = vrot.slane %v917, %v930
        %v932 = vcombine.low %v924, %v931
        %934 = vst [vmem:[%s256] sm:$0xff] %v932
        %s935 = sld [smem:[#allocation2 + $0x80]]
        %v936 = vstv %s935
        %v937 = vmul.f32 %v265, %v936
        %s938 = sld [smem:[#allocation2 + $0x81]]
        %v939 = vstv %s938
        %v940 = vmul.f32 %v267, %v939
        %v941 = vadd.f32 %v937, %v940
        %s942 = sld [smem:[#allocation2 + $0x82]]
        %v943 = vstv %s942
        %v944 = vmul.f32 %v269, %v943
        %v945 = vadd.f32 %v941, %v944
        %s946 = sld [smem:[#allocation2 + $0x83]]
        %v947 = vstv %s946
        %v948 = vmul.f32 %v271, %v947
        %v949 = vadd.f32 %v945, %v948
        %s950 = sld [smem:[#allocation6 + $0x1]]
        %v951 = vstv %s950
        %v952 = vadd.f32 %v949, %v951
        %s953 = sld [smem:[#allocation2 + $0x280]]
        %v954 = vstv %s953
        %v955 = vmul.f32 %v265, %v954
        %s956 = sld [smem:[#allocation2 + $0x281]]
        %v957 = vstv %s956
        %v958 = vmul.f32 %v267, %v957
        %v959 = vadd.f32 %v955, %v958
        %s960 = sld [smem:[#allocation2 + $0x282]]
        %v961 = vstv %s960
        %v962 = vmul.f32 %v269, %v961
        %v963 = vadd.f32 %v959, %v962
        %s964 = sld [smem:[#allocation2 + $0x283]]
        %v965 = vstv %s964
        %v966 = vmul.f32 %v271, %v965
        %v967 = vadd.f32 %v963, %v966
        %s968 = sld [smem:[#allocation6 + $0x5]]
        %v969 = vstv %s968
        %v970 = vadd.f32 %v967, %v969
        %s971 = sld [smem:[#allocation2 + $0x480]]
        %v972 = vstv %s971
        %v973 = vmul.f32 %v265, %v972
        %s974 = sld [smem:[#allocation2 + $0x481]]
        %v975 = vstv %s974
        %v976 = vmul.f32 %v267, %v975
        %v977 = vadd.f32 %v973, %v976
        %s978 = sld [smem:[#allocation2 + $0x482]]
        %v979 = vstv %s978
        %v980 = vmul.f32 %v269, %v979
        %v981 = vadd.f32 %v977, %v980
        %s982 = sld [smem:[#allocation2 + $0x483]]
        %v983 = vstv %s982
        %v984 = vmul.f32 %v271, %v983
        %v985 = vadd.f32 %v981, %v984
        %s986 = sld [smem:[#allocation6 + $0x9]]
        %v987 = vstv %s986
        %v988 = vadd.f32 %v985, %v987
        %s989 = sld [smem:[#allocation2 + $0x680]]
        %v990 = vstv %s989
        %v991 = vmul.f32 %v265, %v990
        %s992 = sld [smem:[#allocation2 + $0x681]]
        %v993 = vstv %s992
        %v994 = vmul.f32 %v267, %v993
        %v995 = vadd.f32 %v991, %v994
        %s996 = sld [smem:[#allocation2 + $0x682]]
        %v997 = vstv %s996
        %v998 = vmul.f32 %v269, %v997
        %v999 = vadd.f32 %v995, %v998
        %s1000 = sld [smem:[#allocation2 + $0x683]]
        %v1001 = vstv %s1000
        %v1002 = vmul.f32 %v271, %v1001
        %v1003 = vadd.f32 %v999, %v1002
        %s1004 = sld [smem:[#allocation6 + $0xd]]
        %v1005 = vstv %s1004
        %v1006 = vadd.f32 %v1003, %v1005
        %v1007 = vxor.u32 %v952, 2147483648
        %v1008 = vxor.u32 %v970, 2147483648
        %v1009 = vxor.u32 %v988, 2147483648
        %v1010 = vxor.u32 %v1006, 2147483648
        %v1011 = vmul.f32 %v1007, 1.442695
        %v1012 = vpow.pop %v1011
        %v1013 = vmul.f32 %v1008, 1.442695
        %v1014 = vpow.pop %v1013
        %v1015 = vmul.f32 %v1009, 1.442695
        %v1016 = vpow.pop %v1015
        %v1017 = vmul.f32 %v1010, 1.442695
        %v1018 = vpow.pop %v1017
        %v1019 = vadd.f32 %v1012, 1.0
        %v1020 = vadd.f32 %v1014, 1.0
        %v1021 = vadd.f32 %v1016, 1.0
        %v1022 = vadd.f32 %v1018, 1.0
        %v1023 = vrcp.pop %v1019
        %v1024 = vmul.f32 1.0, %v1023
        %v1025 = vrcp.pop %v1020
        %v1026 = vmul.f32 1.0, %v1025
        %v1027 = vrcp.pop %v1021
        %v1028 = vmul.f32 1.0, %v1027
        %v1029 = vrcp.pop %v1022
        %v1030 = vmul.f32 1.0, %v1029
        %v1031 = vmul.f32 %v952, %v1024
        %v1032 = vmul.f32 %v970, %v1026
        %v1033 = vmul.f32 %v988, %v1028
        %v1034 = vmul.f32 %v1006, %v1030
        %1035 = vmatprep.subr.mxu0 %v273
        %1036 = vmatpush1.msra.mxu0 %v272
        %1037 = vmatprep.subr.mxu0 %v277
        %1038 = vmatpush1.msra.mxu0 %v276
        %1039 = vmatprep.subr.mxu0 %v281
        %1040 = vmatpush1.msra.mxu0 %v280
        %1041 = vmatprep.subr.mxu0 %v285
        %1042 = vmatpush1.msra.mxu0 %v284
        %1043 = vmatprep.subr.mxu0 %v289
        %1044 = vmatpush1.msra.mxu0 %v288
        %1045 = vmatprep.subr.mxu0 %v293
        %1046 = vmatpush1.msra.mxu0 %v292
        %1047 = vmatprep.subr.mxu0 %v297
        %1048 = vmatpush1.msra.mxu0 %v296
        %1049 = vmatprep.subr.mxu0 %v301
        %1050 = vmatpush1.msra.mxu0 %v300
        %1051 = vmatprep.subr.mxu0 %v305
        %1052 = vmatpush1.msra.mxu0 %v304
        %1053 = vmatprep.subr.mxu0 %v309
        %1054 = vmatpush1.msra.mxu0 %v308
        %1055 = vmatprep.subr.mxu0 %v313
        %1056 = vmatpush1.msra.mxu0 %v312
        %1057 = vmatprep.subr.mxu0 %v317
        %1058 = vmatpush1.msra.mxu0 %v316
        %1059 = vmatprep.subr.mxu0 %v321
        %1060 = vmatpush1.msra.mxu0 %v320
        %1061 = vmatprep.subr.mxu0 %v325
        %1062 = vmatpush1.msra.mxu0 %v324
        %1063 = vmatprep.subr.mxu0 %v329
        %1064 = vmatpush1.msra.mxu0 %v328
        %1065 = vmatprep.subr.mxu0 %v333
        %1066 = vmatpush1.msra.mxu0 %v332
        %1067 = vmatprep.subr.mxu0 %v337
        %1068 = vmatpush1.msra.mxu0 %v336
        %1069 = vmatprep.subr.mxu0 %v341
        %1070 = vmatpush1.msra.mxu0 %v340
        %1071 = vmatprep.subr.mxu0 %v345
        %1072 = vmatpush1.msra.mxu0 %v344
        %1073 = vmatprep.subr.mxu0 %v349
        %1074 = vmatpush1.msra.mxu0 %v348
        %1075 = vmatprep.subr.mxu0 %v353
        %1076 = vmatpush1.msra.mxu0 %v352
        %1077 = vmatprep.subr.mxu0 %v357
        %1078 = vmatpush1.msra.mxu0 %v356
        %1079 = vmatprep.subr.mxu0 %v361
        %1080 = vmatpush1.msra.mxu0 %v360
        %1081 = vmatprep.subr.mxu0 %v365
        %1082 = vmatpush1.msra.mxu0 %v364
        %1083 = vmatprep.subr.mxu0 %v369
        %1084 = vmatpush1.msra.mxu0 %v368
        %1085 = vmatprep.subr.mxu0 %v373
        %1086 = vmatpush1.msra.mxu0 %v372
        %1087 = vmatprep.subr.mxu0 %v377
        %1088 = vmatpush1.msra.mxu0 %v376
        %1089 = vmatprep.subr.mxu0 %v381
        %1090 = vmatpush1.msra.mxu0 %v380
        %1091 = vmatprep.subr.mxu0 %v385
        %1092 = vmatpush1.msra.mxu0 %v384
        %1093 = vmatprep.subr.mxu0 %v389
        %1094 = vmatpush1.msra.mxu0 %v388
        %1095 = vmatprep.subr.mxu0 %v393
        %1096 = vmatpush1.msra.mxu0 %v392
        %1097 = vmatprep.subr.mxu0 %v397
        %1098 = vmatpush1.msra.mxu0 %v396
        %1099 = vmatprep.mubr.f32.mxu0 %v1032
        %1100 = vmatmul.mubr.f32.gmra.mrb[0].mxu0 %v1031
        %v1101 = vpop.f32.mrb[0].mxu0
        %v1102 = vadd.f32 0.0, %v1101
        %v1103 = vpop.f32.mrb[0].mxu0
        %v1104 = vadd.f32 0.0, %v1103
        %1105 = vdwg.mxu0
        %1106 = vmatprep.subr.mxu0 %v401
        %1107 = vmatpush1.msra.mxu0 %v400
        %1108 = vmatprep.subr.mxu0 %v405
        %1109 = vmatpush1.msra.mxu0 %v404
        %1110 = vmatprep.subr.mxu0 %v409
        %1111 = vmatpush1.msra.mxu0 %v408
        %1112 = vmatprep.subr.mxu0 %v413
        %1113 = vmatpush1.msra.mxu0 %v412
        %1114 = vmatprep.subr.mxu0 %v417
        %1115 = vmatpush1.msra.mxu0 %v416
        %1116 = vmatprep.subr.mxu0 %v421
        %1117 = vmatpush1.msra.mxu0 %v420
        %1118 = vmatprep.subr.mxu0 %v425
        %1119 = vmatpush1.msra.mxu0 %v424
        %1120 = vmatprep.subr.mxu0 %v429
        %1121 = vmatpush1.msra.mxu0 %v428
        %1122 = vmatprep.subr.mxu0 %v433
        %1123 = vmatpush1.msra.mxu0 %v432
        %1124 = vmatprep.subr.mxu0 %v437
        %1125 = vmatpush1.msra.mxu0 %v436
        %1126 = vmatprep.subr.mxu0 %v441
        %1127 = vmatpush1.msra.mxu0 %v440
        %1128 = vmatprep.subr.mxu0 %v445
        %1129 = vmatpush1.msra.mxu0 %v444
        %1130 = vmatprep.subr.mxu0 %v449
        %1131 = vmatpush1.msra.mxu0 %v448
        %1132 = vmatprep.subr.mxu0 %v453
        %1133 = vmatpush1.msra.mxu0 %v452
        %1134 = vmatprep.subr.mxu0 %v457
        %1135 = vmatpush1.msra.mxu0 %v456
        %1136 = vmatprep.subr.mxu0 %v461
        %1137 = vmatpush1.msra.mxu0 %v460
        %1138 = vmatprep.subr.mxu0 %v465
        %1139 = vmatpush1.msra.mxu0 %v464
        %1140 = vmatprep.subr.mxu0 %v469
        %1141 = vmatpush1.msra.mxu0 %v468
        %1142 = vmatprep.subr.mxu0 %v473
        %1143 = vmatpush1.msra.mxu0 %v472
        %1144 = vmatprep.subr.mxu0 %v477
        %1145 = vmatpush1.msra.mxu0 %v476
        %1146 = vmatprep.subr.mxu0 %v481
        %1147 = vmatpush1.msra.mxu0 %v480
        %1148 = vmatprep.subr.mxu0 %v485
        %1149 = vmatpush1.msra.mxu0 %v484
        %1150 = vmatprep.subr.mxu0 %v489
        %1151 = vmatpush1.msra.mxu0 %v488
        %1152 = vmatprep.subr.mxu0 %v493
        %1153 = vmatpush1.msra.mxu0 %v492
        %1154 = vmatprep.subr.mxu0 %v497
        %1155 = vmatpush1.msra.mxu0 %v496
        %1156 = vmatprep.subr.mxu0 %v501
        %1157 = vmatpush1.msra.mxu0 %v500
        %1158 = vmatprep.subr.mxu0 %v505
        %1159 = vmatpush1.msra.mxu0 %v504
        %1160 = vmatprep.subr.mxu0 %v509
        %1161 = vmatpush1.msra.mxu0 %v508
        %1162 = vmatprep.subr.mxu0 %v513
        %1163 = vmatpush1.msra.mxu0 %v512
        %1164 = vmatprep.subr.mxu0 %v517
        %1165 = vmatpush1.msra.mxu0 %v516
        %1166 = vmatprep.subr.mxu0 %v521
        %1167 = vmatpush1.msra.mxu0 %v520
        %1168 = vmatprep.subr.mxu0 %v525
        %1169 = vmatpush1.msra.mxu0 %v524
        %1170 = vmatprep.mubr.f32.mxu0 %v1034
        %1171 = vmatmul.mubr.f32.gmra.mrb[0].mxu0 %v1033
        %v1172 = vpop.f32.mrb[0].mxu0
        %v1173 = vadd.f32 %v1102, %v1172
        %v1174 = vpop.f32.mrb[0].mxu0
        %v1175 = vadd.f32 %v1104, %v1174
        %1176 = vdwg.mxu0
        %1177 = vmatprep.subr.mxu0 %v275
        %1178 = vmatpush1.msra.mxu0 %v274
        %1179 = vmatprep.subr.mxu0 %v279
        %1180 = vmatpush1.msra.mxu0 %v278
        %1181 = vmatprep.subr.mxu0 %v283
        %1182 = vmatpush1.msra.mxu0 %v282
        %1183 = vmatprep.subr.mxu0 %v287
        %1184 = vmatpush1.msra.mxu0 %v286
        %1185 = vmatprep.subr.mxu0 %v291
        %1186 = vmatpush1.msra.mxu0 %v290
        %1187 = vmatprep.subr.mxu0 %v295
        %1188 = vmatpush1.msra.mxu0 %v294
        %1189 = vmatprep.subr.mxu0 %v299
        %1190 = vmatpush1.msra.mxu0 %v298
        %1191 = vmatprep.subr.mxu0 %v303
        %1192 = vmatpush1.msra.mxu0 %v302
        %1193 = vmatprep.subr.mxu0 %v307
        %1194 = vmatpush1.msra.mxu0 %v306
        %1195 = vmatprep.subr.mxu0 %v311
        %1196 = vmatpush1.msra.mxu0 %v310
        %1197 = vmatprep.subr.mxu0 %v315
        %1198 = vmatpush1.msra.mxu0 %v314
        %1199 = vmatprep.subr.mxu0 %v319
        %1200 = vmatpush1.msra.mxu0 %v318
        %1201 = vmatprep.subr.mxu0 %v323
        %1202 = vmatpush1.msra.mxu0 %v322
        %1203 = vmatprep.subr.mxu0 %v327
        %1204 = vmatpush1.msra.mxu0 %v326
        %1205 = vmatprep.subr.mxu0 %v331
        %1206 = vmatpush1.msra.mxu0 %v330
        %1207 = vmatprep.subr.mxu0 %v335
        %1208 = vmatpush1.msra.mxu0 %v334
        %1209 = vmatprep.subr.mxu0 %v339
        %1210 = vmatpush1.msra.mxu0 %v338
        %1211 = vmatprep.subr.mxu0 %v343
        %1212 = vmatpush1.msra.mxu0 %v342
        %1213 = vmatprep.subr.mxu0 %v347
        %1214 = vmatpush1.msra.mxu0 %v346
        %1215 = vmatprep.subr.mxu0 %v351
        %1216 = vmatpush1.msra.mxu0 %v350
        %1217 = vmatprep.subr.mxu0 %v355
        %1218 = vmatpush1.msra.mxu0 %v354
        %1219 = vmatprep.subr.mxu0 %v359
        %1220 = vmatpush1.msra.mxu0 %v358
        %1221 = vmatprep.subr.mxu0 %v363
        %1222 = vmatpush1.msra.mxu0 %v362
        %1223 = vmatprep.subr.mxu0 %v367
        %1224 = vmatpush1.msra.mxu0 %v366
        %1225 = vmatprep.subr.mxu0 %v371
        %1226 = vmatpush1.msra.mxu0 %v370
        %1227 = vmatprep.subr.mxu0 %v375
        %1228 = vmatpush1.msra.mxu0 %v374
        %1229 = vmatprep.subr.mxu0 %v379
        %1230 = vmatpush1.msra.mxu0 %v378
        %1231 = vmatprep.subr.mxu0 %v383
        %1232 = vmatpush1.msra.mxu0 %v382
        %1233 = vmatprep.subr.mxu0 %v387
        %1234 = vmatpush1.msra.mxu0 %v386
        %1235 = vmatprep.subr.mxu0 %v391
        %1236 = vmatpush1.msra.mxu0 %v390
        %1237 = vmatprep.subr.mxu0 %v395
        %1238 = vmatpush1.msra.mxu0 %v394
        %1239 = vmatprep.subr.mxu0 %v399
        %1240 = vmatpush1.msra.mxu0 %v398
        %1241 = vmatprep.mubr.f32.mxu0 %v1032
        %1242 = vmatmul.mubr.f32.gmra.mrb[0].mxu0 %v1031
        %v1243 = vpop.f32.mrb[0].mxu0
        %v1244 = vadd.f32 0.0, %v1243
        %v1245 = vpop.f32.mrb[0].mxu0
        %v1246 = vadd.f32 0.0, %v1245
        %1247 = vdwg.mxu0
        %1248 = vmatprep.subr.mxu0 %v403
        %1249 = vmatpush1.msra.mxu0 %v402
        %1250 = vmatprep.subr.mxu0 %v407
        %1251 = vmatpush1.msra.mxu0 %v406
        %1252 = vmatprep.subr.mxu0 %v411
        %1253 = vmatpush1.msra.mxu0 %v410
        %1254 = vmatprep.subr.mxu0 %v415
        %1255 = vmatpush1.msra.mxu0 %v414
        %1256 = vmatprep.subr.mxu0 %v419
        %1257 = vmatpush1.msra.mxu0 %v418
        %1258 = vmatprep.subr.mxu0 %v423
        %1259 = vmatpush1.msra.mxu0 %v422
        %1260 = vmatprep.subr.mxu0 %v427
        %1261 = vmatpush1.msra.mxu0 %v426
        %1262 = vmatprep.subr.mxu0 %v431
        %1263 = vmatpush1.msra.mxu0 %v430
        %1264 = vmatprep.subr.mxu0 %v435
        %1265 = vmatpush1.msra.mxu0 %v434
        %1266 = vmatprep.subr.mxu0 %v439
        %1267 = vmatpush1.msra.mxu0 %v438
        %1268 = vmatprep.subr.mxu0 %v443
        %1269 = vmatpush1.msra.mxu0 %v442
        %1270 = vmatprep.subr.mxu0 %v447
        %1271 = vmatpush1.msra.mxu0 %v446
        %1272 = vmatprep.subr.mxu0 %v451
        %1273 = vmatpush1.msra.mxu0 %v450
        %1274 = vmatprep.subr.mxu0 %v455
        %1275 = vmatpush1.msra.mxu0 %v454
        %1276 = vmatprep.subr.mxu0 %v459
        %1277 = vmatpush1.msra.mxu0 %v458
        %1278 = vmatprep.subr.mxu0 %v463
        %1279 = vmatpush1.msra.mxu0 %v462
        %1280 = vmatprep.subr.mxu0 %v467
        %1281 = vmatpush1.msra.mxu0 %v466
        %1282 = vmatprep.subr.mxu0 %v471
        %1283 = vmatpush1.msra.mxu0 %v470
        %1284 = vmatprep.subr.mxu0 %v475
        %1285 = vmatpush1.msra.mxu0 %v474
        %1286 = vmatprep.subr.mxu0 %v479
        %1287 = vmatpush1.msra.mxu0 %v478
        %1288 = vmatprep.subr.mxu0 %v483
        %1289 = vmatpush1.msra.mxu0 %v482
        %1290 = vmatprep.subr.mxu0 %v487
        %1291 = vmatpush1.msra.mxu0 %v486
        %1292 = vmatprep.subr.mxu0 %v491
        %1293 = vmatpush1.msra.mxu0 %v490
        %1294 = vmatprep.subr.mxu0 %v495
        %1295 = vmatpush1.msra.mxu0 %v494
        %1296 = vmatprep.subr.mxu0 %v499
        %1297 = vmatpush1.msra.mxu0 %v498
        %1298 = vmatprep.subr.mxu0 %v503
        %1299 = vmatpush1.msra.mxu0 %v502
        %1300 = vmatprep.subr.mxu0 %v507
        %1301 = vmatpush1.msra.mxu0 %v506
        %1302 = vmatprep.subr.mxu0 %v511
        %1303 = vmatpush1.msra.mxu0 %v510
        %1304 = vmatprep.subr.mxu0 %v515
        %1305 = vmatpush1.msra.mxu0 %v514
        %1306 = vmatprep.subr.mxu0 %v519
        %1307 = vmatpush1.msra.mxu0 %v518
        %1308 = vmatprep.subr.mxu0 %v523
        %1309 = vmatpush1.msra.mxu0 %v522
        %1310 = vmatprep.subr.mxu0 %v527
        %1311 = vmatpush1.msra.mxu0 %v526
        %1312 = vmatprep.mubr.f32.mxu0 %v1034
        %1313 = vmatmul.mubr.f32.gmra.mrb[0].mxu0 %v1033
        %v1314 = vpop.f32.mrb[0].mxu0
        %v1315 = vadd.f32 %v1244, %v1314
        %v1316 = vpop.f32.mrb[0].mxu0
        %v1317 = vadd.f32 %v1246, %v1316
        %1318 = vdwg.mxu0
        %v1323 = vcombine.low %v1173, %v1175
        %v1324 = vcombine.low %v1315, %v1317
        %v1326 = vunpack.c.l.s4 1983009808
        %v1327 = vunpack.c.0.s8 %v1326
        %v1328 = vlaneseq
        %v1329 = vshrl.u32 %v1328, 7
        %v1330 = vsub.s32 %v1327, %v1329
        %v1331 = vrot.slane %v1323, %v1330
        %v1333 = vunpack.c.l.s4 1983009808
        %v1334 = vunpack.c.0.s8 %v1333
        %v1335 = vlaneseq
        %v1336 = vshrl.u32 %v1335, 7
        %v1337 = vsub.s32 %v1334, %v1336
        %v1338 = vrot.slane %v1324, %v1337
        %v1339 = vcombine.low %v1331, %v1338
        %s1341 = scalar_lea.vmem %s256, 8 [#allocation9]
        %1342 = vst [vmem:[%s1341] sm:$0xff] %v1339
        %s1343 = sld [smem:[#allocation2 + $0x100]]
        %v1344 = vstv %s1343
        %v1345 = vmul.f32 %v265, %v1344
        %s1346 = sld [smem:[#allocation2 + $0x101]]
        %v1347 = vstv %s1346
        %v1348 = vmul.f32 %v267, %v1347
        %v1349 = vadd.f32 %v1345, %v1348
        %s1350 = sld [smem:[#allocation2 + $0x102]]
        %v1351 = vstv %s1350
        %v1352 = vmul.f32 %v269, %v1351
        %v1353 = vadd.f32 %v1349, %v1352
        %s1354 = sld [smem:[#allocation2 + $0x103]]
        %v1355 = vstv %s1354
        %v1356 = vmul.f32 %v271, %v1355
        %v1357 = vadd.f32 %v1353, %v1356
        %s1358 = sld [smem:[#allocation6 + $0x2]]
        %v1359 = vstv %s1358
        %v1360 = vadd.f32 %v1357, %v1359
        %s1361 = sld [smem:[#allocation2 + $0x300]]
        %v1362 = vstv %s1361
        %v1363 = vmul.f32 %v265, %v1362
        %s1364 = sld [smem:[#allocation2 + $0x301]]
        %v1365 = vstv %s1364
        %v1366 = vmul.f32 %v267, %v1365
        %v1367 = vadd.f32 %v1363, %v1366
        %s1368 = sld [smem:[#allocation2 + $0x302]]
        %v1369 = vstv %s1368
        %v1370 = vmul.f32 %v269, %v1369
        %v1371 = vadd.f32 %v1367, %v1370
        %s1372 = sld [smem:[#allocation2 + $0x303]]
        %v1373 = vstv %s1372
        %v1374 = vmul.f32 %v271, %v1373
        %v1375 = vadd.f32 %v1371, %v1374
        %s1376 = sld [smem:[#allocation6 + $0x6]]
        %v1377 = vstv %s1376
        %v1378 = vadd.f32 %v1375, %v1377
        %s1379 = sld [smem:[#allocation2 + $0x500]]
        %v1380 = vstv %s1379
        %v1381 = vmul.f32 %v265, %v1380
        %s1382 = sld [smem:[#allocation2 + $0x501]]
        %v1383 = vstv %s1382
        %v1384 = vmul.f32 %v267, %v1383
        %v1385 = vadd.f32 %v1381, %v1384
        %s1386 = sld [smem:[#allocation2 + $0x502]]
        %v1387 = vstv %s1386
        %v1388 = vmul.f32 %v269, %v1387
        %v1389 = vadd.f32 %v1385, %v1388
        %s1390 = sld [smem:[#allocation2 + $0x503]]
        %v1391 = vstv %s1390
        %v1392 = vmul.f32 %v271, %v1391
        %v1393 = vadd.f32 %v1389, %v1392
        %s1394 = sld [smem:[#allocation6 + $0xa]]
        %v1395 = vstv %s1394
        %v1396 = vadd.f32 %v1393, %v1395
        %s1397 = sld [smem:[#allocation2 + $0x700]]
        %v1398 = vstv %s1397
        %v1399 = vmul.f32 %v265, %v1398
        %s1400 = sld [smem:[#allocation2 + $0x701]]
        %v1401 = vstv %s1400
        %v1402 = vmul.f32 %v267, %v1401
        %v1403 = vadd.f32 %v1399, %v1402
        %s1404 = sld [smem:[#allocation2 + $0x702]]
        %v1405 = vstv %s1404
        %v1406 = vmul.f32 %v269, %v1405
        %v1407 = vadd.f32 %v1403, %v1406
        %s1408 = sld [smem:[#allocation2 + $0x703]]
        %v1409 = vstv %s1408
        %v1410 = vmul.f32 %v271, %v1409
        %v1411 = vadd.f32 %v1407, %v1410
        %s1412 = sld [smem:[#allocation6 + $0xe]]
        %v1413 = vstv %s1412
        %v1414 = vadd.f32 %v1411, %v1413
        %v1415 = vxor.u32 %v1360, 2147483648
        %v1416 = vxor.u32 %v1378, 2147483648
        %v1417 = vxor.u32 %v1396, 2147483648
        %v1418 = vxor.u32 %v1414, 2147483648
        %v1419 = vmul.f32 %v1415, 1.442695
        %v1420 = vpow.pop %v1419
        %v1421 = vmul.f32 %v1416, 1.442695
        %v1422 = vpow.pop %v1421
        %v1423 = vmul.f32 %v1417, 1.442695
        %v1424 = vpow.pop %v1423
        %v1425 = vmul.f32 %v1418, 1.442695
        %v1426 = vpow.pop %v1425
        %v1427 = vadd.f32 %v1420, 1.0
        %v1428 = vadd.f32 %v1422, 1.0
        %v1429 = vadd.f32 %v1424, 1.0
        %v1430 = vadd.f32 %v1426, 1.0
        %v1431 = vrcp.pop %v1427
        %v1432 = vmul.f32 1.0, %v1431
        %v1433 = vrcp.pop %v1428
        %v1434 = vmul.f32 1.0, %v1433
        %v1435 = vrcp.pop %v1429
        %v1436 = vmul.f32 1.0, %v1435
        %v1437 = vrcp.pop %v1430
        %v1438 = vmul.f32 1.0, %v1437
        %v1439 = vmul.f32 %v1360, %v1432
        %v1440 = vmul.f32 %v1378, %v1434
        %v1441 = vmul.f32 %v1396, %v1436
        %v1442 = vmul.f32 %v1414, %v1438
        %1443 = vmatprep.subr.mxu0 %v273
        %1444 = vmatpush1.msra.mxu0 %v272
        %1445 = vmatprep.subr.mxu0 %v277
        %1446 = vmatpush1.msra.mxu0 %v276
        %1447 = vmatprep.subr.mxu0 %v281
        %1448 = vmatpush1.msra.mxu0 %v280
        %1449 = vmatprep.subr.mxu0 %v285
        %1450 = vmatpush1.msra.mxu0 %v284
        %1451 = vmatprep.subr.mxu0 %v289
        %1452 = vmatpush1.msra.mxu0 %v288
        %1453 = vmatprep.subr.mxu0 %v293
        %1454 = vmatpush1.msra.mxu0 %v292
        %1455 = vmatprep.subr.mxu0 %v297
        %1456 = vmatpush1.msra.mxu0 %v296
        %1457 = vmatprep.subr.mxu0 %v301
        %1458 = vmatpush1.msra.mxu0 %v300
        %1459 = vmatprep.subr.mxu0 %v305
        %1460 = vmatpush1.msra.mxu0 %v304
        %1461 = vmatprep.subr.mxu0 %v309
        %1462 = vmatpush1.msra.mxu0 %v308
        %1463 = vmatprep.subr.mxu0 %v313
        %1464 = vmatpush1.msra.mxu0 %v312
        %1465 = vmatprep.subr.mxu0 %v317
        %1466 = vmatpush1.msra.mxu0 %v316
        %1467 = vmatprep.subr.mxu0 %v321
        %1468 = vmatpush1.msra.mxu0 %v320
        %1469 = vmatprep.subr.mxu0 %v325
        %1470 = vmatpush1.msra.mxu0 %v324
        %1471 = vmatprep.subr.mxu0 %v329
        %1472 = vmatpush1.msra.mxu0 %v328
        %1473 = vmatprep.subr.mxu0 %v333
        %1474 = vmatpush1.msra.mxu0 %v332
        %1475 = vmatprep.subr.mxu0 %v337
        %1476 = vmatpush1.msra.mxu0 %v336
        %1477 = vmatprep.subr.mxu0 %v341
        %1478 = vmatpush1.msra.mxu0 %v340
        %1479 = vmatprep.subr.mxu0 %v345
        %1480 = vmatpush1.msra.mxu0 %v344
        %1481 = vmatprep.subr.mxu0 %v349
        %1482 = vmatpush1.msra.mxu0 %v348
        %1483 = vmatprep.subr.mxu0 %v353
        %1484 = vmatpush1.msra.mxu0 %v352
        %1485 = vmatprep.subr.mxu0 %v357
        %1486 = vmatpush1.msra.mxu0 %v356
        %1487 = vmatprep.subr.mxu0 %v361
        %1488 = vmatpush1.msra.mxu0 %v360
        %1489 = vmatprep.subr.mxu0 %v365
        %1490 = vmatpush1.msra.mxu0 %v364
        %1491 = vmatprep.subr.mxu0 %v369
        %1492 = vmatpush1.msra.mxu0 %v368
        %1493 = vmatprep.subr.mxu0 %v373
        %1494 = vmatpush1.msra.mxu0 %v372
        %1495 = vmatprep.subr.mxu0 %v377
        %1496 = vmatpush1.msra.mxu0 %v376
        %1497 = vmatprep.subr.mxu0 %v381
        %1498 = vmatpush1.msra.mxu0 %v380
        %1499 = vmatprep.subr.mxu0 %v385
        %1500 = vmatpush1.msra.mxu0 %v384
        %1501 = vmatprep.subr.mxu0 %v389
        %1502 = vmatpush1.msra.mxu0 %v388
        %1503 = vmatprep.subr.mxu0 %v393
        %1504 = vmatpush1.msra.mxu0 %v392
        %1505 = vmatprep.subr.mxu0 %v397
        %1506 = vmatpush1.msra.mxu0 %v396
        %1507 = vmatprep.mubr.f32.mxu0 %v1440
        %1508 = vmatmul.mubr.f32.gmra.mrb[0].mxu0 %v1439
        %v1509 = vpop.f32.mrb[0].mxu0
        %v1510 = vadd.f32 0.0, %v1509
        %v1511 = vpop.f32.mrb[0].mxu0
        %v1512 = vadd.f32 0.0, %v1511
        %1513 = vdwg.mxu0
        %1514 = vmatprep.subr.mxu0 %v401
        %1515 = vmatpush1.msra.mxu0 %v400
        %1516 = vmatprep.subr.mxu0 %v405
        %1517 = vmatpush1.msra.mxu0 %v404
        %1518 = vmatprep.subr.mxu0 %v409
        %1519 = vmatpush1.msra.mxu0 %v408
        %1520 = vmatprep.subr.mxu0 %v413
        %1521 = vmatpush1.msra.mxu0 %v412
        %1522 = vmatprep.subr.mxu0 %v417
        %1523 = vmatpush1.msra.mxu0 %v416
        %1524 = vmatprep.subr.mxu0 %v421
        %1525 = vmatpush1.msra.mxu0 %v420
        %1526 = vmatprep.subr.mxu0 %v425
        %1527 = vmatpush1.msra.mxu0 %v424
        %1528 = vmatprep.subr.mxu0 %v429
        %1529 = vmatpush1.msra.mxu0 %v428
        %1530 = vmatprep.subr.mxu0 %v433
        %1531 = vmatpush1.msra.mxu0 %v432
        %1532 = vmatprep.subr.mxu0 %v437
        %1533 = vmatpush1.msra.mxu0 %v436
        %1534 = vmatprep.subr.mxu0 %v441
        %1535 = vmatpush1.msra.mxu0 %v440
        %1536 = vmatprep.subr.mxu0 %v445
        %1537 = vmatpush1.msra.mxu0 %v444
        %1538 = vmatprep.subr.mxu0 %v449
        %1539 = vmatpush1.msra.mxu0 %v448
        %1540 = vmatprep.subr.mxu0 %v453
        %1541 = vmatpush1.msra.mxu0 %v452
        %1542 = vmatprep.subr.mxu0 %v457
        %1543 = vmatpush1.msra.mxu0 %v456
        %1544 = vmatprep.subr.mxu0 %v461
        %1545 = vmatpush1.msra.mxu0 %v460
        %1546 = vmatprep.subr.mxu0 %v465
        %1547 = vmatpush1.msra.mxu0 %v464
        %1548 = vmatprep.subr.mxu0 %v469
        %1549 = vmatpush1.msra.mxu0 %v468
        %1550 = vmatprep.subr.mxu0 %v473
        %1551 = vmatpush1.msra.mxu0 %v472
        %1552 = vmatprep.subr.mxu0 %v477
        %1553 = vmatpush1.msra.mxu0 %v476
        %1554 = vmatprep.subr.mxu0 %v481
        %1555 = vmatpush1.msra.mxu0 %v480
        %1556 = vmatprep.subr.mxu0 %v485
        %1557 = vmatpush1.msra.mxu0 %v484
        %1558 = vmatprep.subr.mxu0 %v489
        %1559 = vmatpush1.msra.mxu0 %v488
        %1560 = vmatprep.subr.mxu0 %v493
        %1561 = vmatpush1.msra.mxu0 %v492
        %1562 = vmatprep.subr.mxu0 %v497
        %1563 = vmatpush1.msra.mxu0 %v496
        %1564 = vmatprep.subr.mxu0 %v501
        %1565 = vmatpush1.msra.mxu0 %v500
        %1566 = vmatprep.subr.mxu0 %v505
        %1567 = vmatpush1.msra.mxu0 %v504
        %1568 = vmatprep.subr.mxu0 %v509
        %1569 = vmatpush1.msra.mxu0 %v508
        %1570 = vmatprep.subr.mxu0 %v513
        %1571 = vmatpush1.msra.mxu0 %v512
        %1572 = vmatprep.subr.mxu0 %v517
        %1573 = vmatpush1.msra.mxu0 %v516
        %1574 = vmatprep.subr.mxu0 %v521
        %1575 = vmatpush1.msra.mxu0 %v520
        %1576 = vmatprep.subr.mxu0 %v525
        %1577 = vmatpush1.msra.mxu0 %v524
        %1578 = vmatprep.mubr.f32.mxu0 %v1442
        %1579 = vmatmul.mubr.f32.gmra.mrb[0].mxu0 %v1441
        %v1580 = vpop.f32.mrb[0].mxu0
        %v1581 = vadd.f32 %v1510, %v1580
        %v1582 = vpop.f32.mrb[0].mxu0
        %v1583 = vadd.f32 %v1512, %v1582
        %1584 = vdwg.mxu0
        %1585 = vmatprep.subr.mxu0 %v275
        %1586 = vmatpush1.msra.mxu0 %v274
        %1587 = vmatprep.subr.mxu0 %v279
        %1588 = vmatpush1.msra.mxu0 %v278
        %1589 = vmatprep.subr.mxu0 %v283
        %1590 = vmatpush1.msra.mxu0 %v282
        %1591 = vmatprep.subr.mxu0 %v287
        %1592 = vmatpush1.msra.mxu0 %v286
        %1593 = vmatprep.subr.mxu0 %v291
        %1594 = vmatpush1.msra.mxu0 %v290
        %1595 = vmatprep.subr.mxu0 %v295
        %1596 = vmatpush1.msra.mxu0 %v294
        %1597 = vmatprep.subr.mxu0 %v299
        %1598 = vmatpush1.msra.mxu0 %v298
        %1599 = vmatprep.subr.mxu0 %v303
        %1600 = vmatpush1.msra.mxu0 %v302
        %1601 = vmatprep.subr.mxu0 %v307
        %1602 = vmatpush1.msra.mxu0 %v306
        %1603 = vmatprep.subr.mxu0 %v311
        %1604 = vmatpush1.msra.mxu0 %v310
        %1605 = vmatprep.subr.mxu0 %v315
        %1606 = vmatpush1.msra.mxu0 %v314
        %1607 = vmatprep.subr.mxu0 %v319
        %1608 = vmatpush1.msra.mxu0 %v318
        %1609 = vmatprep.subr.mxu0 %v323
        %1610 = vmatpush1.msra.mxu0 %v322
        %1611 = vmatprep.subr.mxu0 %v327
        %1612 = vmatpush1.msra.mxu0 %v326
        %1613 = vmatprep.subr.mxu0 %v331
        %1614 = vmatpush1.msra.mxu0 %v330
        %1615 = vmatprep.subr.mxu0 %v335
        %1616 = vmatpush1.msra.mxu0 %v334
        %1617 = vmatprep.subr.mxu0 %v339
        %1618 = vmatpush1.msra.mxu0 %v338
        %1619 = vmatprep.subr.mxu0 %v343
        %1620 = vmatpush1.msra.mxu0 %v342
        %1621 = vmatprep.subr.mxu0 %v347
        %1622 = vmatpush1.msra.mxu0 %v346
        %1623 = vmatprep.subr.mxu0 %v351
        %1624 = vmatpush1.msra.mxu0 %v350
        %1625 = vmatprep.subr.mxu0 %v355
        %1626 = vmatpush1.msra.mxu0 %v354
        %1627 = vmatprep.subr.mxu0 %v359
        %1628 = vmatpush1.msra.mxu0 %v358
        %1629 = vmatprep.subr.mxu0 %v363
        %1630 = vmatpush1.msra.mxu0 %v362
        %1631 = vmatprep.subr.mxu0 %v367
        %1632 = vmatpush1.msra.mxu0 %v366
        %1633 = vmatprep.subr.mxu0 %v371
        %1634 = vmatpush1.msra.mxu0 %v370
        %1635 = vmatprep.subr.mxu0 %v375
        %1636 = vmatpush1.msra.mxu0 %v374
        %1637 = vmatprep.subr.mxu0 %v379
        %1638 = vmatpush1.msra.mxu0 %v378
        %1639 = vmatprep.subr.mxu0 %v383
        %1640 = vmatpush1.msra.mxu0 %v382
        %1641 = vmatprep.subr.mxu0 %v387
        %1642 = vmatpush1.msra.mxu0 %v386
        %1643 = vmatprep.subr.mxu0 %v391
        %1644 = vmatpush1.msra.mxu0 %v390
        %1645 = vmatprep.subr.mxu0 %v395
        %1646 = vmatpush1.msra.mxu0 %v394
        %1647 = vmatprep.subr.mxu0 %v399
        %1648 = vmatpush1.msra.mxu0 %v398
        %1649 = vmatprep.mubr.f32.mxu0 %v1440
        %1650 = vmatmul.mubr.f32.gmra.mrb[0].mxu0 %v1439
        %v1651 = vpop.f32.mrb[0].mxu0
        %v1652 = vadd.f32 0.0, %v1651
        %v1653 = vpop.f32.mrb[0].mxu0
        %v1654 = vadd.f32 0.0, %v1653
        %1655 = vdwg.mxu0
        %1656 = vmatprep.subr.mxu0 %v403
        %1657 = vmatpush1.msra.mxu0 %v402
        %1658 = vmatprep.subr.mxu0 %v407
        %1659 = vmatpush1.msra.mxu0 %v406
        %1660 = vmatprep.subr.mxu0 %v411
        %1661 = vmatpush1.msra.mxu0 %v410
        %1662 = vmatprep.subr.mxu0 %v415
        %1663 = vmatpush1.msra.mxu0 %v414
        %1664 = vmatprep.subr.mxu0 %v419
        %1665 = vmatpush1.msra.mxu0 %v418
        %1666 = vmatprep.subr.mxu0 %v423
        %1667 = vmatpush1.msra.mxu0 %v422
        %1668 = vmatprep.subr.mxu0 %v427
        %1669 = vmatpush1.msra.mxu0 %v426
        %1670 = vmatprep.subr.mxu0 %v431
        %1671 = vmatpush1.msra.mxu0 %v430
        %1672 = vmatprep.subr.mxu0 %v435
        %1673 = vmatpush1.msra.mxu0 %v434
        %1674 = vmatprep.subr.mxu0 %v439
        %1675 = vmatpush1.msra.mxu0 %v438
        %1676 = vmatprep.subr.mxu0 %v443
        %1677 = vmatpush1.msra.mxu0 %v442
        %1678 = vmatprep.subr.mxu0 %v447
        %1679 = vmatpush1.msra.mxu0 %v446
        %1680 = vmatprep.subr.mxu0 %v451
        %1681 = vmatpush1.msra.mxu0 %v450
        %1682 = vmatprep.subr.mxu0 %v455
        %1683 = vmatpush1.msra.mxu0 %v454
        %1684 = vmatprep.subr.mxu0 %v459
        %1685 = vmatpush1.msra.mxu0 %v458
        %1686 = vmatprep.subr.mxu0 %v463
        %1687 = vmatpush1.msra.mxu0 %v462
        %1688 = vmatprep.subr.mxu0 %v467
        %1689 = vmatpush1.msra.mxu0 %v466
        %1690 = vmatprep.subr.mxu0 %v471
        %1691 = vmatpush1.msra.mxu0 %v470
        %1692 = vmatprep.subr.mxu0 %v475
        %1693 = vmatpush1.msra.mxu0 %v474
        %1694 = vmatprep.subr.mxu0 %v479
        %1695 = vmatpush1.msra.mxu0 %v478
        %1696 = vmatprep.subr.mxu0 %v483
        %1697 = vmatpush1.msra.mxu0 %v482
        %1698 = vmatprep.subr.mxu0 %v487
        %1699 = vmatpush1.msra.mxu0 %v486
        %1700 = vmatprep.subr.mxu0 %v491
        %1701 = vmatpush1.msra.mxu0 %v490
        %1702 = vmatprep.subr.mxu0 %v495
        %1703 = vmatpush1.msra.mxu0 %v494
        %1704 = vmatprep.subr.mxu0 %v499
        %1705 = vmatpush1.msra.mxu0 %v498
        %1706 = vmatprep.subr.mxu0 %v503
        %1707 = vmatpush1.msra.mxu0 %v502
        %1708 = vmatprep.subr.mxu0 %v507
        %1709 = vmatpush1.msra.mxu0 %v506
        %1710 = vmatprep.subr.mxu0 %v511
        %1711 = vmatpush1.msra.mxu0 %v510
        %1712 = vmatprep.subr.mxu0 %v515
        %1713 = vmatpush1.msra.mxu0 %v514
        %1714 = vmatprep.subr.mxu0 %v519
        %1715 = vmatpush1.msra.mxu0 %v518
        %1716 = vmatprep.subr.mxu0 %v523
        %1717 = vmatpush1.msra.mxu0 %v522
        %1718 = vmatprep.subr.mxu0 %v527
        %1719 = vmatpush1.msra.mxu0 %v526
        %1720 = vmatprep.mubr.f32.mxu0 %v1442
        %1721 = vmatmul.mubr.f32.gmra.mrb[0].mxu0 %v1441
        %v1722 = vpop.f32.mrb[0].mxu0
        %v1723 = vadd.f32 %v1652, %v1722
        %v1724 = vpop.f32.mrb[0].mxu0
        %v1725 = vadd.f32 %v1654, %v1724
        %1726 = vdwg.mxu0
        %v1731 = vcombine.low %v1581, %v1583
        %v1732 = vcombine.low %v1723, %v1725
        %v1734 = vunpack.c.l.s4 1983009808
        %v1735 = vunpack.c.0.s8 %v1734
        %v1736 = vlaneseq
        %v1737 = vshrl.u32 %v1736, 7
        %v1738 = vsub.s32 %v1735, %v1737
        %v1739 = vrot.slane %v1731, %v1738
        %v1741 = vunpack.c.l.s4 1983009808
        %v1742 = vunpack.c.0.s8 %v1741
        %v1743 = vlaneseq
        %v1744 = vshrl.u32 %v1743, 7
        %v1745 = vsub.s32 %v1742, %v1744
        %v1746 = vrot.slane %v1732, %v1745
        %v1747 = vcombine.low %v1739, %v1746
        %s1749 = scalar_lea.vmem %s256, 16 [#allocation9]
        %1750 = vst [vmem:[%s1749] sm:$0xff] %v1747
        %s1751 = sld [smem:[#allocation2 + $0x180]]
        %v1752 = vstv %s1751
        %v1753 = vmul.f32 %v265, %v1752
        %s1754 = sld [smem:[#allocation2 + $0x181]]
        %v1755 = vstv %s1754
        %v1756 = vmul.f32 %v267, %v1755
        %v1757 = vadd.f32 %v1753, %v1756
        %s1758 = sld [smem:[#allocation2 + $0x182]]
        %v1759 = vstv %s1758
        %v1760 = vmul.f32 %v269, %v1759
        %v1761 = vadd.f32 %v1757, %v1760
        %s1762 = sld [smem:[#allocation2 + $0x183]]
        %v1763 = vstv %s1762
        %v1764 = vmul.f32 %v271, %v1763
        %v1765 = vadd.f32 %v1761, %v1764
        %s1766 = sld [smem:[#allocation6 + $0x3]]
        %v1767 = vstv %s1766
        %v1768 = vadd.f32 %v1765, %v1767
        %s1769 = sld [smem:[#allocation2 + $0x380]]
        %v1770 = vstv %s1769
        %v1771 = vmul.f32 %v265, %v1770
        %s1772 = sld [smem:[#allocation2 + $0x381]]
        %v1773 = vstv %s1772
        %v1774 = vmul.f32 %v267, %v1773
        %v1775 = vadd.f32 %v1771, %v1774
        %s1776 = sld [smem:[#allocation2 + $0x382]]
        %v1777 = vstv %s1776
        %v1778 = vmul.f32 %v269, %v1777
        %v1779 = vadd.f32 %v1775, %v1778
        %s1780 = sld [smem:[#allocation2 + $0x383]]
        %v1781 = vstv %s1780
        %v1782 = vmul.f32 %v271, %v1781
        %v1783 = vadd.f32 %v1779, %v1782
        %s1784 = sld [smem:[#allocation6 + $0x7]]
        %v1785 = vstv %s1784
        %v1786 = vadd.f32 %v1783, %v1785
        %s1787 = sld [smem:[#allocation2 + $0x580]]
        %v1788 = vstv %s1787
        %v1789 = vmul.f32 %v265, %v1788
        %s1790 = sld [smem:[#allocation2 + $0x581]]
        %v1791 = vstv %s1790
        %v1792 = vmul.f32 %v267, %v1791
        %v1793 = vadd.f32 %v1789, %v1792
        %s1794 = sld [smem:[#allocation2 + $0x582]]
        %v1795 = vstv %s1794
        %v1796 = vmul.f32 %v269, %v1795
        %v1797 = vadd.f32 %v1793, %v1796
        %s1798 = sld [smem:[#allocation2 + $0x583]]
        %v1799 = vstv %s1798
        %v1800 = vmul.f32 %v271, %v1799
        %v1801 = vadd.f32 %v1797, %v1800
        %s1802 = sld [smem:[#allocation6 + $0xb]]
        %v1803 = vstv %s1802
        %v1804 = vadd.f32 %v1801, %v1803
        %s1805 = sld [smem:[#allocation2 + $0x780]]
        %v1806 = vstv %s1805
        %v1807 = vmul.f32 %v265, %v1806
        %s1808 = sld [smem:[#allocation2 + $0x781]]
        %v1809 = vstv %s1808
        %v1810 = vmul.f32 %v267, %v1809
        %v1811 = vadd.f32 %v1807, %v1810
        %s1812 = sld [smem:[#allocation2 + $0x782]]
        %v1813 = vstv %s1812
        %v1814 = vmul.f32 %v269, %v1813
        %v1815 = vadd.f32 %v1811, %v1814
        %s1816 = sld [smem:[#allocation2 + $0x783]]
        %v1817 = vstv %s1816
        %v1818 = vmul.f32 %v271, %v1817
        %v1819 = vadd.f32 %v1815, %v1818
        %s1820 = sld [smem:[#allocation6 + $0xf]]
        %v1821 = vstv %s1820
        %v1822 = vadd.f32 %v1819, %v1821
        %v1823 = vxor.u32 %v1768, 2147483648
        %v1824 = vxor.u32 %v1786, 2147483648
        %v1825 = vxor.u32 %v1804, 2147483648
        %v1826 = vxor.u32 %v1822, 2147483648
        %v1827 = vmul.f32 %v1823, 1.442695
        %v1828 = vpow.pop %v1827
        %v1829 = vmul.f32 %v1824, 1.442695
        %v1830 = vpow.pop %v1829
        %v1831 = vmul.f32 %v1825, 1.442695
        %v1832 = vpow.pop %v1831
        %v1833 = vmul.f32 %v1826, 1.442695
        %v1834 = vpow.pop %v1833
        %v1835 = vadd.f32 %v1828, 1.0
        %v1836 = vadd.f32 %v1830, 1.0
        %v1837 = vadd.f32 %v1832, 1.0
        %v1838 = vadd.f32 %v1834, 1.0
        %v1839 = vrcp.pop %v1835
        %v1840 = vmul.f32 1.0, %v1839
        %v1841 = vrcp.pop %v1836
        %v1842 = vmul.f32 1.0, %v1841
        %v1843 = vrcp.pop %v1837
        %v1844 = vmul.f32 1.0, %v1843
        %v1845 = vrcp.pop %v1838
        %v1846 = vmul.f32 1.0, %v1845
        %v1847 = vmul.f32 %v1768, %v1840
        %v1848 = vmul.f32 %v1786, %v1842
        %v1849 = vmul.f32 %v1804, %v1844
        %v1850 = vmul.f32 %v1822, %v1846
        %1851 = vmatprep.subr.mxu0 %v273
        %1852 = vmatpush1.msra.mxu0 %v272
        %1853 = vmatprep.subr.mxu0 %v277
        %1854 = vmatpush1.msra.mxu0 %v276
        %1855 = vmatprep.subr.mxu0 %v281
        %1856 = vmatpush1.msra.mxu0 %v280
        %1857 = vmatprep.subr.mxu0 %v285
        %1858 = vmatpush1.msra.mxu0 %v284
        %1859 = vmatprep.subr.mxu0 %v289
        %1860 = vmatpush1.msra.mxu0 %v288
        %1861 = vmatprep.subr.mxu0 %v293
        %1862 = vmatpush1.msra.mxu0 %v292
        %1863 = vmatprep.subr.mxu0 %v297
        %1864 = vmatpush1.msra.mxu0 %v296
        %1865 = vmatprep.subr.mxu0 %v301
        %1866 = vmatpush1.msra.mxu0 %v300
        %1867 = vmatprep.subr.mxu0 %v305
        %1868 = vmatpush1.msra.mxu0 %v304
        %1869 = vmatprep.subr.mxu0 %v309
        %1870 = vmatpush1.msra.mxu0 %v308
        %1871 = vmatprep.subr.mxu0 %v313
        %1872 = vmatpush1.msra.mxu0 %v312
        %1873 = vmatprep.subr.mxu0 %v317
        %1874 = vmatpush1.msra.mxu0 %v316
        %1875 = vmatprep.subr.mxu0 %v321
        %1876 = vmatpush1.msra.mxu0 %v320
        %1877 = vmatprep.subr.mxu0 %v325
        %1878 = vmatpush1.msra.mxu0 %v324
        %1879 = vmatprep.subr.mxu0 %v329
        %1880 = vmatpush1.msra.mxu0 %v328
        %1881 = vmatprep.subr.mxu0 %v333
        %1882 = vmatpush1.msra.mxu0 %v332
        %1883 = vmatprep.subr.mxu0 %v337
        %1884 = vmatpush1.msra.mxu0 %v336
        %1885 = vmatprep.subr.mxu0 %v341
        %1886 = vmatpush1.msra.mxu0 %v340
        %1887 = vmatprep.subr.mxu0 %v345
        %1888 = vmatpush1.msra.mxu0 %v344
        %1889 = vmatprep.subr.mxu0 %v349
        %1890 = vmatpush1.msra.mxu0 %v348
        %1891 = vmatprep.subr.mxu0 %v353
        %1892 = vmatpush1.msra.mxu0 %v352
        %1893 = vmatprep.subr.mxu0 %v357
        %1894 = vmatpush1.msra.mxu0 %v356
        %1895 = vmatprep.subr.mxu0 %v361
        %1896 = vmatpush1.msra.mxu0 %v360
        %1897 = vmatprep.subr.mxu0 %v365
        %1898 = vmatpush1.msra.mxu0 %v364
        %1899 = vmatprep.subr.mxu0 %v369
        %1900 = vmatpush1.msra.mxu0 %v368
        %1901 = vmatprep.subr.mxu0 %v373
        %1902 = vmatpush1.msra.mxu0 %v372
        %1903 = vmatprep.subr.mxu0 %v377
        %1904 = vmatpush1.msra.mxu0 %v376
        %1905 = vmatprep.subr.mxu0 %v381
        %1906 = vmatpush1.msra.mxu0 %v380
        %1907 = vmatprep.subr.mxu0 %v385
        %1908 = vmatpush1.msra.mxu0 %v384
        %1909 = vmatprep.subr.mxu0 %v389
        %1910 = vmatpush1.msra.mxu0 %v388
        %1911 = vmatprep.subr.mxu0 %v393
        %1912 = vmatpush1.msra.mxu0 %v392
        %1913 = vmatprep.subr.mxu0 %v397
        %1914 = vmatpush1.msra.mxu0 %v396
        %1915 = vmatprep.mubr.f32.mxu0 %v1848
        %1916 = vmatmul.mubr.f32.gmra.mrb[0].mxu0 %v1847
        %v1917 = vpop.f32.mrb[0].mxu0
        %v1918 = vadd.f32 0.0, %v1917
        %v1919 = vpop.f32.mrb[0].mxu0
        %v1920 = vadd.f32 0.0, %v1919
        %1921 = vdwg.mxu0
        %1922 = vmatprep.subr.mxu0 %v401
        %1923 = vmatpush1.msra.mxu0 %v400
        %1924 = vmatprep.subr.mxu0 %v405
        %1925 = vmatpush1.msra.mxu0 %v404
        %1926 = vmatprep.subr.mxu0 %v409
        %1927 = vmatpush1.msra.mxu0 %v408
        %1928 = vmatprep.subr.mxu0 %v413
        %1929 = vmatpush1.msra.mxu0 %v412
        %1930 = vmatprep.subr.mxu0 %v417
        %1931 = vmatpush1.msra.mxu0 %v416
        %1932 = vmatprep.subr.mxu0 %v421
        %1933 = vmatpush1.msra.mxu0 %v420
        %1934 = vmatprep.subr.mxu0 %v425
        %1935 = vmatpush1.msra.mxu0 %v424
        %1936 = vmatprep.subr.mxu0 %v429
        %1937 = vmatpush1.msra.mxu0 %v428
        %1938 = vmatprep.subr.mxu0 %v433
        %1939 = vmatpush1.msra.mxu0 %v432
        %1940 = vmatprep.subr.mxu0 %v437
        %1941 = vmatpush1.msra.mxu0 %v436
        %1942 = vmatprep.subr.mxu0 %v441
        %1943 = vmatpush1.msra.mxu0 %v440
        %1944 = vmatprep.subr.mxu0 %v445
        %1945 = vmatpush1.msra.mxu0 %v444
        %1946 = vmatprep.subr.mxu0 %v449
        %1947 = vmatpush1.msra.mxu0 %v448
        %1948 = vmatprep.subr.mxu0 %v453
        %1949 = vmatpush1.msra.mxu0 %v452
        %1950 = vmatprep.subr.mxu0 %v457
        %1951 = vmatpush1.msra.mxu0 %v456
        %1952 = vmatprep.subr.mxu0 %v461
        %1953 = vmatpush1.msra.mxu0 %v460
        %1954 = vmatprep.subr.mxu0 %v465
        %1955 = vmatpush1.msra.mxu0 %v464
        %1956 = vmatprep.subr.mxu0 %v469
        %1957 = vmatpush1.msra.mxu0 %v468
        %1958 = vmatprep.subr.mxu0 %v473
        %1959 = vmatpush1.msra.mxu0 %v472
        %1960 = vmatprep.subr.mxu0 %v477
        %1961 = vmatpush1.msra.mxu0 %v476
        %1962 = vmatprep.subr.mxu0 %v481
        %1963 = vmatpush1.msra.mxu0 %v480
        %1964 = vmatprep.subr.mxu0 %v485
        %1965 = vmatpush1.msra.mxu0 %v484
        %1966 = vmatprep.subr.mxu0 %v489
        %1967 = vmatpush1.msra.mxu0 %v488
        %1968 = vmatprep.subr.mxu0 %v493
        %1969 = vmatpush1.msra.mxu0 %v492
        %1970 = vmatprep.subr.mxu0 %v497
        %1971 = vmatpush1.msra.mxu0 %v496
        %1972 = vmatprep.subr.mxu0 %v501
        %1973 = vmatpush1.msra.mxu0 %v500
        %1974 = vmatprep.subr.mxu0 %v505
        %1975 = vmatpush1.msra.mxu0 %v504
        %1976 = vmatprep.subr.mxu0 %v509
        %1977 = vmatpush1.msra.mxu0 %v508
        %1978 = vmatprep.subr.mxu0 %v513
        %1979 = vmatpush1.msra.mxu0 %v512
        %1980 = vmatprep.subr.mxu0 %v517
        %1981 = vmatpush1.msra.mxu0 %v516
        %1982 = vmatprep.subr.mxu0 %v521
        %1983 = vmatpush1.msra.mxu0 %v520
        %1984 = vmatprep.subr.mxu0 %v525
        %1985 = vmatpush1.msra.mxu0 %v524
        %1986 = vmatprep.mubr.f32.mxu0 %v1850
        %1987 = vmatmul.mubr.f32.gmra.mrb[0].mxu0 %v1849
        %v1988 = vpop.f32.mrb[0].mxu0
        %v1989 = vadd.f32 %v1918, %v1988
        %v1990 = vpop.f32.mrb[0].mxu0
        %v1991 = vadd.f32 %v1920, %v1990
        %1992 = vdwg.mxu0
        %1993 = vmatprep.subr.mxu0 %v275
        %1994 = vmatpush1.msra.mxu0 %v274
        %1995 = vmatprep.subr.mxu0 %v279
        %1996 = vmatpush1.msra.mxu0 %v278
        %1997 = vmatprep.subr.mxu0 %v283
        %1998 = vmatpush1.msra.mxu0 %v282
        %1999 = vmatprep.subr.mxu0 %v287
        %2000 = vmatpush1.msra.mxu0 %v286
        %2001 = vmatprep.subr.mxu0 %v291
        %2002 = vmatpush1.msra.mxu0 %v290
        %2003 = vmatprep.subr.mxu0 %v295
        %2004 = vmatpush1.msra.mxu0 %v294
        %2005 = vmatprep.subr.mxu0 %v299
        %2006 = vmatpush1.msra.mxu0 %v298
        %2007 = vmatprep.subr.mxu0 %v303
        %2008 = vmatpush1.msra.mxu0 %v302
        %2009 = vmatprep.subr.mxu0 %v307
        %2010 = vmatpush1.msra.mxu0 %v306
        %2011 = vmatprep.subr.mxu0 %v311
        %2012 = vmatpush1.msra.mxu0 %v310
        %2013 = vmatprep.subr.mxu0 %v315
        %2014 = vmatpush1.msra.mxu0 %v314
        %2015 = vmatprep.subr.mxu0 %v319
        %2016 = vmatpush1.msra.mxu0 %v318
        %2017 = vmatprep.subr.mxu0 %v323
        %2018 = vmatpush1.msra.mxu0 %v322
        %2019 = vmatprep.subr.mxu0 %v327
        %2020 = vmatpush1.msra.mxu0 %v326
        %2021 = vmatprep.subr.mxu0 %v331
        %2022 = vmatpush1.msra.mxu0 %v330
        %2023 = vmatprep.subr.mxu0 %v335
        %2024 = vmatpush1.msra.mxu0 %v334
        %2025 = vmatprep.subr.mxu0 %v339
        %2026 = vmatpush1.msra.mxu0 %v338
        %2027 = vmatprep.subr.mxu0 %v343
        %2028 = vmatpush1.msra.mxu0 %v342
        %2029 = vmatprep.subr.mxu0 %v347
        %2030 = vmatpush1.msra.mxu0 %v346
        %2031 = vmatprep.subr.mxu0 %v351
        %2032 = vmatpush1.msra.mxu0 %v350
        %2033 = vmatprep.subr.mxu0 %v355
        %2034 = vmatpush1.msra.mxu0 %v354
        %2035 = vmatprep.subr.mxu0 %v359
        %2036 = vmatpush1.msra.mxu0 %v358
        %2037 = vmatprep.subr.mxu0 %v363
        %2038 = vmatpush1.msra.mxu0 %v362
        %2039 = vmatprep.subr.mxu0 %v367
        %2040 = vmatpush1.msra.mxu0 %v366
        %2041 = vmatprep.subr.mxu0 %v371
        %2042 = vmatpush1.msra.mxu0 %v370
        %2043 = vmatprep.subr.mxu0 %v375
        %2044 = vmatpush1.msra.mxu0 %v374
        %2045 = vmatprep.subr.mxu0 %v379
        %2046 = vmatpush1.msra.mxu0 %v378
        %2047 = vmatprep.subr.mxu0 %v383
        %2048 = vmatpush1.msra.mxu0 %v382
        %2049 = vmatprep.subr.mxu0 %v387
        %2050 = vmatpush1.msra.mxu0 %v386
        %2051 = vmatprep.subr.mxu0 %v391
        %2052 = vmatpush1.msra.mxu0 %v390
        %2053 = vmatprep.subr.mxu0 %v395
        %2054 = vmatpush1.msra.mxu0 %v394
        %2055 = vmatprep.subr.mxu0 %v399
        %2056 = vmatpush1.msra.mxu0 %v398
        %2057 = vmatprep.mubr.f32.mxu0 %v1848
        %2058 = vmatmul.mubr.f32.gmra.mrb[0].mxu0 %v1847
        %v2059 = vpop.f32.mrb[0].mxu0
        %v2060 = vadd.f32 0.0, %v2059
        %v2061 = vpop.f32.mrb[0].mxu0
        %v2062 = vadd.f32 0.0, %v2061
        %2063 = vdwg.mxu0
        %2064 = vmatprep.subr.mxu0 %v403
        %2065 = vmatpush1.msra.mxu0 %v402
        %2066 = vmatprep.subr.mxu0 %v407
        %2067 = vmatpush1.msra.mxu0 %v406
        %2068 = vmatprep.subr.mxu0 %v411
        %2069 = vmatpush1.msra.mxu0 %v410
        %2070 = vmatprep.subr.mxu0 %v415
        %2071 = vmatpush1.msra.mxu0 %v414
        %2072 = vmatprep.subr.mxu0 %v419
        %2073 = vmatpush1.msra.mxu0 %v418
        %2074 = vmatprep.subr.mxu0 %v423
        %2075 = vmatpush1.msra.mxu0 %v422
        %2076 = vmatprep.subr.mxu0 %v427
        %2077 = vmatpush1.msra.mxu0 %v426
        %2078 = vmatprep.subr.mxu0 %v431
        %2079 = vmatpush1.msra.mxu0 %v430
        %2080 = vmatprep.subr.mxu0 %v435
        %2081 = vmatpush1.msra.mxu0 %v434
        %2082 = vmatprep.subr.mxu0 %v439
        %2083 = vmatpush1.msra.mxu0 %v438
        %2084 = vmatprep.subr.mxu0 %v443
        %2085 = vmatpush1.msra.mxu0 %v442
        %2086 = vmatprep.subr.mxu0 %v447
        %2087 = vmatpush1.msra.mxu0 %v446
        %2088 = vmatprep.subr.mxu0 %v451
        %2089 = vmatpush1.msra.mxu0 %v450
        %2090 = vmatprep.subr.mxu0 %v455
        %2091 = vmatpush1.msra.mxu0 %v454
        %2092 = vmatprep.subr.mxu0 %v459
        %2093 = vmatpush1.msra.mxu0 %v458
        %2094 = vmatprep.subr.mxu0 %v463
        %2095 = vmatpush1.msra.mxu0 %v462
        %2096 = vmatprep.subr.mxu0 %v467
        %2097 = vmatpush1.msra.mxu0 %v466
        %2098 = vmatprep.subr.mxu0 %v471
        %2099 = vmatpush1.msra.mxu0 %v470
        %2100 = vmatprep.subr.mxu0 %v475
        %2101 = vmatpush1.msra.mxu0 %v474
        %2102 = vmatprep.subr.mxu0 %v479
        %2103 = vmatpush1.msra.mxu0 %v478
        %2104 = vmatprep.subr.mxu0 %v483
        %2105 = vmatpush1.msra.mxu0 %v482
        %2106 = vmatprep.subr.mxu0 %v487
        %2107 = vmatpush1.msra.mxu0 %v486
        %2108 = vmatprep.subr.mxu0 %v491
        %2109 = vmatpush1.msra.mxu0 %v490
        %2110 = vmatprep.subr.mxu0 %v495
        %2111 = vmatpush1.msra.mxu0 %v494
        %2112 = vmatprep.subr.mxu0 %v499
        %2113 = vmatpush1.msra.mxu0 %v498
        %2114 = vmatprep.subr.mxu0 %v503
        %2115 = vmatpush1.msra.mxu0 %v502
        %2116 = vmatprep.subr.mxu0 %v507
        %2117 = vmatpush1.msra.mxu0 %v506
        %2118 = vmatprep.subr.mxu0 %v511
        %2119 = vmatpush1.msra.mxu0 %v510
        %2120 = vmatprep.subr.mxu0 %v515
        %2121 = vmatpush1.msra.mxu0 %v514
        %2122 = vmatprep.subr.mxu0 %v519
        %2123 = vmatpush1.msra.mxu0 %v518
        %2124 = vmatprep.subr.mxu0 %v523
        %2125 = vmatpush1.msra.mxu0 %v522
        %2126 = vmatprep.subr.mxu0 %v527
        %2127 = vmatpush1.msra.mxu0 %v526
        %2128 = vmatprep.mubr.f32.mxu0 %v1850
        %2129 = vmatmul.mubr.f32.gmra.mrb[0].mxu0 %v1849
        %v2130 = vpop.f32.mrb[0].mxu0
        %v2131 = vadd.f32 %v2060, %v2130
        %v2132 = vpop.f32.mrb[0].mxu0
        %v2133 = vadd.f32 %v2062, %v2132
        %2134 = vdwg.mxu0
        %v2139 = vcombine.low %v1989, %v1991
        %v2140 = vcombine.low %v2131, %v2133
        %v2142 = vunpack.c.l.s4 1983009808
        %v2143 = vunpack.c.0.s8 %v2142
        %v2144 = vlaneseq
        %v2145 = vshrl.u32 %v2144, 7
        %v2146 = vsub.s32 %v2143, %v2145
        %v2147 = vrot.slane %v2139, %v2146
        %v2149 = vunpack.c.l.s4 1983009808
        %v2150 = vunpack.c.0.s8 %v2149
        %v2151 = vlaneseq
        %v2152 = vshrl.u32 %v2151, 7
        %v2153 = vsub.s32 %v2150, %v2152
        %v2154 = vrot.slane %v2140, %v2153
        %v2155 = vcombine.low %v2147, %v2154
        %s2157 = scalar_lea.vmem %s256, 24 [#allocation9]
        %2158 = vst [vmem:[%s2157] sm:$0xff] %v2155
        %s2159 = sand.u32 %s134, 1
        %s2160 = scalar_lea.sflag [#allocation4], %s2159
        %s2161 = sand.u32 %s134, 1
        %s2162 = smul.addr %s2161, 32
        %s2163 = scalar_lea.vmem [#allocation9], %s2162
        // Predicated region
        $region49: #{tpu_custom_call.1} parent=35 // pred_check
          %p2164 = pneg %p144
        $region50: #{tpu_custom_call.1} parent=35 // pred_check_branch
          %2166 = sbr.rel (%p2164) target = $region52
        $region51: #{tpu_custom_call.1} parent=35 // pred_region
          %s2168 = ssub.s32 512, 512
          %2169 = vsyncadd %s2160, %s2168
          %s2170 = smul.addr %s26, 4
          %s2171 = smul.addr %s25, 16
          %s2172 = sadd.s32 %s2170, %s2171
          %s2173 = smul.addr %s2172, 32
          %s2174 = scalar_lea.hbm %s4, %s2173
          %s2175 = sshll.u32 %s2163, 4
          %s2176 = int_to_ptr.vmem [resolvable:$true] %s2175
          %2181 = dma.vmem_to_hbm [thread:$0]  %s2176, 512, %s2174, %s2160, 128, 128, 8
        $region52: #{tpu_custom_call.1} parent=35 // pred_fallthru
          _
      $region36: #{tpu_custom_call.1} parent=5 // pred_fallthru
        _
      %p2182 = scmp.le.s32.totalorder 2, %s16
      // Predicated region
      $region53: #{tpu_custom_call.1} parent=5 // pred_check
        %p2183 = pneg %p2182
      $region54: #{tpu_custom_call.1} parent=5 // pred_check_branch
        %2185 = sbr.rel (%p2183) target = $region56
      $region55: #{tpu_custom_call.1} parent=5 // pred_region
        %s2186 = ssub.s32 %s16, 2
        // Predicated region
        $region57: #{tpu_custom_call.1} parent=55 // pred_check
          %p2187 = pneg %p150
        $region58: #{tpu_custom_call.1} parent=55 // pred_check_branch
          %2189 = sbr.rel (%p2187) target = $region60
        $region59: #{tpu_custom_call.1} parent=55 // pred_region
          %s2190 = sand.u32 %s135, 1
          %s2191 = scalar_lea.sflag [#allocation4], %s2190
          %s2192 = sand.u32 %s135, 1
          %s2193 = smul.addr %s2192, 32
          %s2194 = scalar_lea.vmem [#allocation9], %s2193
          %2195 = dma.done %s2191, 512
        $region60: #{tpu_custom_call.1} parent=55 // pred_fallthru
          _
      $region56: #{tpu_custom_call.1} parent=5 // pred_fallthru
        _
    $region6: #{tpu_custom_call.1} parent=1 // loop_footer
      %s20 = sadd.s32 1, %s16
    $region7: #{tpu_custom_call.1} parent=1 // loop_footer_branch
      %15 = sbr.rel target = $region3
    $region8: #{tpu_custom_call.1} parent=1 // loop_exit
      _
    %2196 = vsyncpa [#allocation3], 1
    %s2197 = scalar_lea.sflag [#allocation3], 1
    %2198 = vsyncpa %s2197, 1
    %2199 = vsyncpa [#allocation4], 1
    %s2200 = scalar_lea.sflag [#allocation4], 1
    %2201 = vsyncpa %s2200, 1
    %2202 = vsyncpa [#allocation5], 1
    %s2203 = scalar_lea.sflag [#allocation5], 1
    %2204 = vsyncpa %s2203, 1
    %2205 = vsyncpa [#allocation7], 1

</llo_original>
